<compile_context>
chip_gen: v7x
topology: tpu7x:2x2x1
jax: 0.10.0
libtpu: 0.0.40
codegen_flags: <defaults>
</compile_context>

<pallas_src>
import math
import jax
import jax.numpy as jnp
from jax import lax
from jax.experimental import pallas as pl
from jax.experimental.pallas import tpu as pltpu

ATT_DIM = 100        # self.attention_dim in the PyTorch module (softmax scale)
ATT_DIM_PAD = 128    # lane-padded projection width used on the MXU


# ---------------------------------------------------------------------------
# Kernel 1: iem_pos attention hot path (BB batch rows per grid step)
# ---------------------------------------------------------------------------
def _attention_kernel(x_ref, m_ref, offdiag_ref, wq_ref, wk_ref,
                      final_ref, aff_ref):
    x = x_ref[...]                 # [BB, L, H]  (inputs_emb + masked pos_emb)
    m = m_ref[...]                 # [BB, L]     float mask
    offdiag = offdiag_ref[...]     # [L, L]      1 - I  (precomputed)
    wq = wq_ref[...]               # [H, A_pad]
    wk = wk_ref[...]               # [H, A_pad]

    BB, L, H = x.shape

    # Q/K projections as one big-M matmul: [BB*L, H] @ [H, A_pad]
    x2 = x.reshape(BB * L, H)
    q = jnp.tanh(jnp.dot(x2, wq, preferred_element_type=jnp.float32))
    k = jnp.tanh(jnp.dot(x2, wk, preferred_element_type=jnp.float32))
    q = q.reshape(BB, L, ATT_DIM_PAD)
    k = k.reshape(BB, L, ATT_DIM_PAD)

    # affinity = Q K^T / sqrt(attention_dim)   (scale stays sqrt(100))
    aff = jnp.einsum('bqa,bka->bqk', q, k,
                     preferred_element_type=jnp.float32) / math.sqrt(
                         float(ATT_DIM))                                # [BB,L,L]
    aff_ref[...] = aff

    # (affinity - diag_embed(diag)) * masks.view(B,1,L), summed over dim 2
    col_masked = aff * offdiag[None, :, :] * m[:, None, :]
    score = jnp.sum(col_masked, axis=2) * m                             # [BB, L]

    # softmax over the L positions (dim=1), then re-mask + re-normalize
    smax = jnp.max(score, axis=1, keepdims=True)
    e = jnp.exp(score - smax)
    p = e / jnp.sum(e, axis=1, keepdims=True)
    p = p * m
    p = p / jnp.sum(p, axis=1, keepdims=True)

    # final = sum(alpha * inputs_emb, dim=1)
    final_ref[...] = jnp.sum(p[:, :, None] * x, axis=1)                 # [BB, H]


def _attention_block_size(B):
    # Whole batch in one step when small; otherwise a sublane-friendly
    # multiple of 8 that divides B; fall back to the whole batch.
    if B <= 32:
        return B
    for bb in (32, 16, 8):
        if B % bb == 0:
            return bb
    return B


def iem_pos_attention(x, masks, wq_pad, wk_pad, offdiag):
    B, L, H = x.shape
    A = wq_pad.shape[1]
    bb = _attention_block_size(B)
    final, aff = pl.pallas_call(
        _attention_kernel,
        out_shape=(jax.ShapeDtypeStruct((B, H), jnp.float32),
                   jax.ShapeDtypeStruct((B, L, L), jnp.float32)),
        grid=(B // bb,),
        in_specs=[pl.BlockSpec((bb, L, H), lambda b: (b, 0, 0)),
                  pl.BlockSpec((bb, L), lambda b: (b, 0)),
                  pl.BlockSpec((L, L), lambda b: (0, 0)),
                  pl.BlockSpec((H, A), lambda b: (0, 0)),
                  pl.BlockSpec((H, A), lambda b: (0, 0))],
        out_specs=(pl.BlockSpec((bb, H), lambda b: (b, 0)),
                   pl.BlockSpec((bb, L, L), lambda b: (b, 0, 0))),
        compiler_params=pltpu.CompilerParams(
            dimension_semantics=("parallel",)),
    )(x, masks, offdiag, wq_pad, wk_pad)
    return final, aff


# ---------------------------------------------------------------------------
# Kernel 2a: final linear transform + contrastive pos/neg scores (tiny)
# ---------------------------------------------------------------------------
def _rep_cl_kernel(cat_ref, wl_ref, bl_ref, temb_ref, clm_ref,
                   rep_ref, cl_ref):
    rep = jnp.dot(cat_ref[...], wl_ref[...],
                  preferred_element_type=jnp.float32) + bl_ref[...]     # [B, H]
    rep_ref[...] = rep

    # cl_matrix = targets_emb @ final_rep.T  (contract last dims, no transpose)
    clm = lax.dot_general(temb_ref[...], rep,
                          dimension_numbers=(((1,), (1,)), ((), ())),
                          preferred_element_type=jnp.float32)           # [B, B]
    mask = clm_ref[...]
    inv_b = 1.0 / jnp.float32(clm.shape[1])
    pos = jnp.sum(clm * mask, axis=1, keepdims=True) * inv_b            # mean dim=1
    neg = jnp.sum(clm * (1.0 - mask), axis=1, keepdims=True) * inv_b
    cl_ref[...] = jnp.concatenate([pos, neg], axis=1)                   # [B, 2]


def rep_and_contrastive(cat, w_lin, b_lin, targets_emb, cl_mask):
    B, H = targets_emb.shape
    vmem = pl.BlockSpec(memory_space=pltpu.MemorySpace.VMEM)
    rep, cl = pl.pallas_call(
        _rep_cl_kernel,
        out_shape=(jax.ShapeDtypeStruct((B, H), jnp.float32),
                   jax.ShapeDtypeStruct((B, 2), jnp.float32)),
        in_specs=[vmem] * 5,
        out_specs=(vmem, vmem),
    )(cat, w_lin, b_lin, targets_emb, cl_mask)
    return rep, cl


# ---------------------------------------------------------------------------
# Kernel 2b: scores = final_rep @ embedding.T, tiled over the item dimension
# ---------------------------------------------------------------------------
def _scores_kernel(rep_ref, emb_ref, out_ref):
    # out[b, n] = sum_h rep[b, h] * emb[n, h]   (MXU-native transposed contract)
    out_ref[...] = lax.dot_general(
        rep_ref[...], emb_ref[...],
        dimension_numbers=(((1,), (1,)), ((), ())),
        preferred_element_type=jnp.float32)


def scores_matmul(rep, emb, *, tn=512):
    B, H = rep.shape
    N = emb.shape[0]
    # Lane-dense (multiple of 128) item tiles when tiling; whole table if small.
    tile_n = N if N <= tn else tn
    grid_n = pl.cdiv(N, tile_n)
    cost = pl.CostEstimate(flops=2 * B * H * N, transcendentals=0,
                           bytes_accessed=4 * (N * H + B * H + B * N))
    return pl.pallas_call(
        _scores_kernel,
        out_shape=jax.ShapeDtypeStruct((B, N), jnp.float32),
        grid=(grid_n,),
        in_specs=[pl.BlockSpec((B, H), lambda n: (0, 0)),
                  pl.BlockSpec((tile_n, H), lambda n: (n, 0))],
        out_specs=pl.BlockSpec((B, tile_n), lambda n: (0, n)),
        compiler_params=pltpu.CompilerParams(
            dimension_semantics=("parallel",),
            vmem_limit_bytes=32 * 1024 * 1024),  # safe on v5e/v6e/v7x
        cost_estimate=cost,
    )(rep, emb)


# ---------------------------------------------------------------------------
# Parameter init (uniform(-stdv, stdv) with stdv = 1/sqrt(hidden), like torch)
# ---------------------------------------------------------------------------
def init_params(key, n_node, hidden, max_len, att_dim=ATT_DIM):
    stdv = 1.0 / math.sqrt(hidden)
    keys = jax.random.split(key, 6)
    u = lambda k, shape: jax.random.uniform(k, shape, jnp.float32, -stdv, stdv)
    return {
        "embedding": u(keys[0], (n_node, hidden)),           # nn.Embedding
        "pos_embedding": u(keys[1], (max_len + 1, hidden)),  # nn.Embedding
        "wq": u(keys[2], (hidden, att_dim)),                 # Q.weight.T
        "wk": u(keys[3], (hidden, att_dim)),                 # K.weight.T
        "w_lin": u(keys[4], (2 * hidden, hidden)),           # linear_transform.weight.T
        "b_lin": u(keys[5], (1, hidden)),                    # linear_transform.bias
    }


# ---------------------------------------------------------------------------
# Full forward pass (glue in plain JAX, hot paths in Pallas kernels)
# ---------------------------------------------------------------------------
def piecl_forward(params, inputs, masks, pos_masks, targets):
    B, L = inputs.shape
    emb = params["embedding"]

    # last_id = inputs[i][sum(masks[i]) - 1]
    counts = jnp.sum(masks, axis=1).astype(jnp.int32)
    last_id = inputs[jnp.arange(B), counts - 1]

    # iem_pos input: embedding(inputs) + masks * pos_embedding(pos_masks)
    inputs_emb = jnp.take(emb, inputs, axis=0)                        # [B, L, H]
    pos_emb = jnp.take(params["pos_embedding"], pos_masks, axis=0)    # [B, L, H]
    x = inputs_emb + pos_emb * masks[:, :, None]

    # Zero-pad Q/K weights to 128 lanes (tiny, done once per call).
    pad = max(0, ATT_DIM_PAD - params["wq"].shape[1])
    wq_pad = jnp.pad(params["wq"], ((0, 0), (0, pad)))
    wk_pad = jnp.pad(params["wk"], ((0, 0), (0, pad)))

    # Off-diagonal mask built once (hoisted out of the kernel body).
    offdiag = 1.0 - jnp.eye(L, dtype=jnp.float32)

    att_final, affinity = iem_pos_attention(x, masks, wq_pad, wk_pad, offdiag)

    last_emb = jnp.take(emb, last_id, axis=0)                         # [B, H]
    cat = jnp.concatenate([att_final, last_emb], axis=1)              # [B, 2H]

    targets_emb = jnp.take(emb, targets, axis=0)                      # [B, H]
    # cl_block: mask[i][j] = 1 iff targets[i] == targets[j]
    cl_mask = (targets[:, None] == targets[None, :]).astype(jnp.float32)

    rep, cl_score = rep_and_contrastive(cat, params["w_lin"], params["b_lin"],
                                        targets_emb, cl_mask)

    # Scores against the raw embedding table (no emb[1:].T materialization in
    # HBM); drop the padding item's column to match embedding.weight[1:].
    scores_full = scores_matmul(rep, emb)                             # [B, N]
    scores = scores_full[:, 1:]                                       # [B, N-1]
    return scores, cl_score, affinity


if __name__ == "__main__":
    B, L, H, N_NODE, MAX_LEN = 4, 8, 32, 50, 8

    key = jax.random.PRNGKey(0)
    pkey, ikey, mkey, tkey = jax.random.split(key, 4)

    params = init_params(pkey, N_NODE, H, MAX_LEN)

    inputs = jax.random.randint(ikey, (B, L), 1, N_NODE, dtype=jnp.int32)
    lengths = jax.random.randint(mkey, (B,), 1, L + 1, dtype=jnp.int32)
    masks = (jnp.arange(L)[None, :] < lengths[:, None]).astype(jnp.float32)
    pos_masks = ((jnp.arange(L, dtype=jnp.int32)[None, :] + 1)
                 * masks.astype(jnp.int32))                           # 1..len, 0=pad
    targets = jax.random.randint(tkey, (B,), 1, N_NODE, dtype=jnp.int32)

    scores, cl_score, affinity = jax.jit(piecl_forward)(
        params, inputs, masks, pos_masks, targets)
    jax.block_until_ready((scores, cl_score, affinity))

    assert scores.shape == (B, N_NODE - 1)
    assert cl_score.shape == (B, 2)
    assert affinity.shape == (B, L, L)
    print("KERNEL_OK")
</pallas_src>

<mosaic_0001>
module attributes {stable_mosaic.version = 11 : i64} {
  func.func @_attention_kernel(%arg0: i32, %arg1: memref<4x8x32xf32, #tpu.memory_space<vmem>>, %arg2: memref<4x8xf32, #tpu.memory_space<vmem>>, %arg3: memref<8x8xf32, #tpu.memory_space<vmem>>, %arg4: memref<32x128xf32, #tpu.memory_space<vmem>>, %arg5: memref<32x128xf32, #tpu.memory_space<vmem>>, %arg6: memref<4x32xf32, #tpu.memory_space<vmem>>, %arg7: memref<4x8x8xf32, #tpu.memory_space<vmem>>) attributes {dimension_semantics = [#tpu.dimension_semantics<parallel>], iteration_bounds = array<i64: 1>, scalar_prefetch = 0 : i64, scratch_operands = 0 : i64, tpu.core_type = #tpu.core_type<tc>, window_params = [{transform_indices = @transform_0, window_bounds = array<i64: 4, 8, 32>}, {transform_indices = @transform_1, window_bounds = array<i64: 4, 8>}, {pipeline_mode = #tpu.pipeline_mode<synchronous>, transform_indices = @transform_2, window_bounds = array<i64: 8, 8>}, {pipeline_mode = #tpu.pipeline_mode<synchronous>, transform_indices = @transform_3, window_bounds = array<i64: 32, 128>}, {pipeline_mode = #tpu.pipeline_mode<synchronous>, transform_indices = @transform_4, window_bounds = array<i64: 32, 128>}, {transform_indices = @transform_5, window_bounds = array<i64: 4, 32>}, {transform_indices = @transform_6, window_bounds = array<i64: 4, 8, 8>}]} {
    %c0 = arith.constant 0 : index
    %c0_0 = arith.constant 0 : index
    %c0_1 = arith.constant 0 : index
    %0 = vector.load %arg1[%c0, %c0_0, %c0_1] : memref<4x8x32xf32, #tpu.memory_space<vmem>>, vector<4x8x32xf32>
    %c0_2 = arith.constant 0 : index
    %c0_3 = arith.constant 0 : index
    %1 = vector.load %arg2[%c0_2, %c0_3] : memref<4x8xf32, #tpu.memory_space<vmem>>, vector<4x8xf32>
    %c0_4 = arith.constant 0 : index
    %c0_5 = arith.constant 0 : index
    %2 = vector.load %arg3[%c0_4, %c0_5] : memref<8x8xf32, #tpu.memory_space<vmem>>, vector<8x8xf32>
    %c0_6 = arith.constant 0 : index
    %c0_7 = arith.constant 0 : index
    %3 = vector.load %arg4[%c0_6, %c0_7] : memref<32x128xf32, #tpu.memory_space<vmem>>, vector<32x128xf32>
    %c0_8 = arith.constant 0 : index
    %c0_9 = arith.constant 0 : index
    %4 = vector.load %arg5[%c0_8, %c0_9] : memref<32x128xf32, #tpu.memory_space<vmem>>, vector<32x128xf32>
    %5 = vector.shape_cast %0 : vector<4x8x32xf32> to vector<32x32xf32>
    %cst = arith.constant dense<0.000000e+00> : vector<32x128xf32>
    %6 = tpu.matmul %5, %3, %cst {dimension_numbers = #tpu.dot_dimension_numbers<[1], [0], [0], [1], [0, 0, 1, 1], [], []>} : vector<32x32xf32>, vector<32x128xf32>, vector<32x128xf32> -> vector<32x128xf32>
    %7 = math.tanh %6 : vector<32x128xf32>
    %cst_10 = arith.constant dense<0.000000e+00> : vector<32x128xf32>
    %8 = tpu.matmul %5, %4, %cst_10 {dimension_numbers = #tpu.dot_dimension_numbers<[1], [0], [0], [1], [0, 0, 1, 1], [], []>} : vector<32x32xf32>, vector<32x128xf32>, vector<32x128xf32> -> vector<32x128xf32>
    %9 = math.tanh %8 : vector<32x128xf32>
    %10 = vector.shape_cast %7 : vector<32x128xf32> to vector<4x8x128xf32>
    %11 = vector.shape_cast %9 : vector<32x128xf32> to vector<4x8x128xf32>
    "tpu.trace_start"() <{level = 10 : i32, message = "bqa,bka->bqk"}> : () -> ()
    %cst_11 = arith.constant dense<0.000000e+00> : vector<4x8x8xf32>
    %12 = tpu.matmul %10, %11, %cst_11 {dimension_numbers = #tpu.dot_dimension_numbers<[2], [2], [1], [1], [0, 0, 0, 1, 1, 1], [0], [0]>} : vector<4x8x128xf32>, vector<4x8x128xf32>, vector<4x8x8xf32> -> vector<4x8x8xf32>
    "tpu.trace_stop"() : () -> ()
    %cst_12 = arith.constant 1.000000e+01 : f32
    %13 = vector.broadcast %cst_12 : f32 to vector<4x8x8xf32>
    %14 = arith.divf %12, %13 : vector<4x8x8xf32>
    %c0_13 = arith.constant 0 : index
    %c0_14 = arith.constant 0 : index
    %c0_15 = arith.constant 0 : index
    %15 = vector.load %arg7[%c0_13, %c0_14, %c0_15] : memref<4x8x8xf32, #tpu.memory_space<vmem>>, vector<4x8x8xf32>
    tpu.vector_store %arg7[%c0_13, %c0_14, %c0_15], %14 {strides = array<i32>} : memref<4x8x8xf32, #tpu.memory_space<vmem>>, vector<4x8x8xf32>,
    %16 = vector.shape_cast %2 : vector<8x8xf32> to vector<1x8x8xf32>
    %17 = vector.broadcast %16 : vector<1x8x8xf32> to vector<4x8x8xf32>
    %18 = arith.mulf %14, %17 : vector<4x8x8xf32>
    %19 = vector.shape_cast %1 : vector<4x8xf32> to vector<4x1x8xf32>
    %20 = vector.broadcast %19 : vector<4x1x8xf32> to vector<4x8x8xf32>
    %21 = arith.mulf %18, %20 : vector<4x8x8xf32>
    %cst_16 = arith.constant dense<0.000000e+00> : vector<4x8xf32>
    %22 = vector.multi_reduction <add>, %21, %cst_16 [2] : vector<4x8x8xf32> to vector<4x8xf32>
    %23 = arith.mulf %22, %1 : vector<4x8xf32>
    %cst_17 = arith.constant dense<0xFF800000> : vector<4xf32>
    %24 = vector.multi_reduction <maximumf>, %23, %cst_17 [1] : vector<4x8xf32> to vector<4xf32>
    %25 = vector.shape_cast %24 : vector<4xf32> to vector<4x1xf32>
    %26 = vector.broadcast %25 : vector<4x1xf32> to vector<4x8xf32>
    %27 = arith.subf %23, %26 : vector<4x8xf32>
    %28 = math.exp %27 : vector<4x8xf32>
    %cst_18 = arith.constant dense<0.000000e+00> : vector<4xf32>
    %29 = vector.multi_reduction <add>, %28, %cst_18 [1] : vector<4x8xf32> to vector<4xf32>
    %30 = vector.shape_cast %29 : vector<4xf32> to vector<4x1xf32>
    %31 = vector.broadcast %30 : vector<4x1xf32> to vector<4x8xf32>
    %32 = arith.divf %28, %31 : vector<4x8xf32>
    %33 = arith.mulf %32, %1 : vector<4x8xf32>
    %cst_19 = arith.constant dense<0.000000e+00> : vector<4xf32>
    %34 = vector.multi_reduction <add>, %33, %cst_19 [1] : vector<4x8xf32> to vector<4xf32>
    %35 = vector.shape_cast %34 : vector<4xf32> to vector<4x1xf32>
    %36 = vector.broadcast %35 : vector<4x1xf32> to vector<4x8xf32>
    %37 = arith.divf %33, %36 : vector<4x8xf32>
    %38 = vector.shape_cast %37 : vector<4x8xf32> to vector<4x8x1xf32>
    %39 = vector.broadcast %38 : vector<4x8x1xf32> to vector<4x8x32xf32>
    %40 = arith.mulf %39, %0 : vector<4x8x32xf32>
    %cst_20 = arith.constant dense<0.000000e+00> : vector<4x32xf32>
    %41 = vector.multi_reduction <add>, %40, %cst_20 [1] : vector<4x8x32xf32> to vector<4x32xf32>
    %c0_21 = arith.constant 0 : index
    %c0_22 = arith.constant 0 : index
    %42 = vector.load %arg6[%c0_21, %c0_22] : memref<4x32xf32, #tpu.memory_space<vmem>>, vector<4x32xf32>
    tpu.vector_store %arg6[%c0_21, %c0_22], %41 {strides = array<i32>} : memref<4x32xf32, #tpu.memory_space<vmem>>, vector<4x32xf32>,
    return
  }
  func.func @transform_0(%arg0: i32) -> (i32, i32, i32) {
    %c0_i32 = arith.constant 0 : i32
    %c0_i32_0 = arith.constant 0 : i32
    %c0_i32_1 = arith.constant 0 : i32
    return %arg0, %c0_i32, %c0_i32_0 : i32, i32, i32
  }
  func.func @transform_1(%arg0: i32) -> (i32, i32) {
    %c0_i32 = arith.constant 0 : i32
    %c0_i32_0 = arith.constant 0 : i32
    return %arg0, %c0_i32 : i32, i32
  }
  func.func @transform_2(%arg0: i32) -> (i32, i32) {
    %c0_i32 = arith.constant 0 : i32
    %c0_i32_0 = arith.constant 0 : i32
    %c0_i32_1 = arith.constant 0 : i32
    return %c0_i32, %c0_i32_0 : i32, i32
  }
  func.func @transform_3(%arg0: i32) -> (i32, i32) {
    %c0_i32 = arith.constant 0 : i32
    %c0_i32_0 = arith.constant 0 : i32
    %c0_i32_1 = arith.constant 0 : i32
    return %c0_i32, %c0_i32_0 : i32, i32
  }
  func.func @transform_4(%arg0: i32) -> (i32, i32) {
    %c0_i32 = arith.constant 0 : i32
    %c0_i32_0 = arith.constant 0 : i32
    %c0_i32_1 = arith.constant 0 : i32
    return %c0_i32, %c0_i32_0 : i32, i32
  }
  func.func @transform_5(%arg0: i32) -> (i32, i32) {
    %c0_i32 = arith.constant 0 : i32
    %c0_i32_0 = arith.constant 0 : i32
    return %arg0, %c0_i32 : i32, i32
  }
  func.func @transform_6(%arg0: i32) -> (i32, i32, i32) {
    %c0_i32 = arith.constant 0 : i32
    %c0_i32_0 = arith.constant 0 : i32
    %c0_i32_1 = arith.constant 0 : i32
    return %arg0, %c0_i32, %c0_i32_0 : i32, i32, i32
  }
}

module attributes {stable_mosaic.version = 11 : i64} {
  func.func @_rep_cl_kernel(%arg0: memref<4x64xf32, #tpu.memory_space<vmem>>, %arg1: memref<64x32xf32, #tpu.memory_space<vmem>>, %arg2: memref<1x32xf32, #tpu.memory_space<vmem>>, %arg3: memref<4x32xf32, #tpu.memory_space<vmem>>, %arg4: memref<4x4xf32, #tpu.memory_space<vmem>>, %arg5: memref<4x32xf32, #tpu.memory_space<vmem>>, %arg6: memref<4x2xf32, #tpu.memory_space<vmem>>) attributes {dimension_semantics = [], scalar_prefetch = 0 : i64, scratch_operands = 0 : i64, tpu.core_type = #tpu.core_type<tc>} {
    %c0 = arith.constant 0 : index
    %c0_0 = arith.constant 0 : index
    %0 = vector.load %arg0[%c0, %c0_0] : memref<4x64xf32, #tpu.memory_space<vmem>>, vector<4x64xf32>
    %c0_1 = arith.constant 0 : index
    %c0_2 = arith.constant 0 : index
    %1 = vector.load %arg1[%c0_1, %c0_2] : memref<64x32xf32, #tpu.memory_space<vmem>>, vector<64x32xf32>
    %cst = arith.constant dense<0.000000e+00> : vector<4x32xf32>
    %2 = tpu.matmul %0, %1, %cst {dimension_numbers = #tpu.dot_dimension_numbers<[1], [0], [0], [1], [0, 0, 1, 1], [], []>} : vector<4x64xf32>, vector<64x32xf32>, vector<4x32xf32> -> vector<4x32xf32>
    %c0_3 = arith.constant 0 : index
    %c0_4 = arith.constant 0 : index
    %3 = vector.load %arg2[%c0_3, %c0_4] : memref<1x32xf32, #tpu.memory_space<vmem>>, vector<1x32xf32>
    %4 = vector.broadcast %3 : vector<1x32xf32> to vector<4x32xf32>
    %5 = arith.addf %2, %4 : vector<4x32xf32>
    %c0_5 = arith.constant 0 : index
    %c0_6 = arith.constant 0 : index
    %6 = vector.load %arg5[%c0_5, %c0_6] : memref<4x32xf32, #tpu.memory_space<vmem>>, vector<4x32xf32>
    tpu.vector_store %arg5[%c0_5, %c0_6], %5 {strides = array<i32>} : memref<4x32xf32, #tpu.memory_space<vmem>>, vector<4x32xf32>,
    %c0_7 = arith.constant 0 : index
    %c0_8 = arith.constant 0 : index
    %7 = vector.load %arg3[%c0_7, %c0_8] : memref<4x32xf32, #tpu.memory_space<vmem>>, vector<4x32xf32>
    %cst_9 = arith.constant dense<0.000000e+00> : vector<4x4xf32>
    %8 = tpu.matmul %7, %5, %cst_9 {dimension_numbers = #tpu.dot_dimension_numbers<[1], [1], [0], [0], [0, 0, 1, 0], [], []>} : vector<4x32xf32>, vector<4x32xf32>, vector<4x4xf32> -> vector<4x4xf32>
    %c0_10 = arith.constant 0 : index
    %c0_11 = arith.constant 0 : index
    %9 = vector.load %arg4[%c0_10, %c0_11] : memref<4x4xf32, #tpu.memory_space<vmem>>, vector<4x4xf32>
    %cst_12 = arith.constant 1.000000e+00 : f32
    %cst_13 = arith.constant 4.000000e+00 : f32
    %10 = arith.divf %cst_12, %cst_13 : f32
    %11 = arith.mulf %8, %9 : vector<4x4xf32>
    %cst_14 = arith.constant dense<0.000000e+00> : vector<4xf32>
    %12 = vector.multi_reduction <add>, %11, %cst_14 [1] : vector<4x4xf32> to vector<4xf32>
    %13 = vector.shape_cast %12 : vector<4xf32> to vector<4x1xf32>
    %14 = vector.broadcast %10 : f32 to vector<4x1xf32>
    %15 = arith.mulf %13, %14 : vector<4x1xf32>
    %cst_15 = arith.constant 1.000000e+00 : f32
    %16 = vector.broadcast %cst_15 : f32 to vector<4x4xf32>
    %17 = arith.subf %16, %9 : vector<4x4xf32>
    %18 = arith.mulf %8, %17 : vector<4x4xf32>
    %cst_16 = arith.constant dense<0.000000e+00> : vector<4xf32>
    %19 = vector.multi_reduction <add>, %18, %cst_16 [1] : vector<4x4xf32> to vector<4xf32>
    %20 = vector.shape_cast %19 : vector<4xf32> to vector<4x1xf32>
    %21 = vector.broadcast %10 : f32 to vector<4x1xf32>
    %22 = arith.mulf %20, %21 : vector<4x1xf32>
    %23 = tpu.concatenate %15, %22 in 1 : vector<4x1xf32>, vector<4x1xf32> -> vector<4x2xf32>
    %c0_17 = arith.constant 0 : index
    %c0_18 = arith.constant 0 : index
    %24 = vector.load %arg6[%c0_17, %c0_18] : memref<4x2xf32, #tpu.memory_space<vmem>>, vector<4x2xf32>
    tpu.vector_store %arg6[%c0_17, %c0_18], %23 {strides = array<i32>} : memref<4x2xf32, #tpu.memory_space<vmem>>, vector<4x2xf32>,
    return
  }
}

module attributes {stable_mosaic.version = 11 : i64} {
  func.func @_scores_kernel(%arg0: i32, %arg1: memref<4x32xf32, #tpu.memory_space<vmem>>, %arg2: memref<50x32xf32, #tpu.memory_space<vmem>>, %arg3: memref<4x50xf32, #tpu.memory_space<vmem>>) attributes {dimension_semantics = [#tpu.dimension_semantics<parallel>], iteration_bounds = array<i64: 1>, scalar_prefetch = 0 : i64, scratch_operands = 0 : i64, tpu.core_type = #tpu.core_type<tc>, window_params = [{pipeline_mode = #tpu.pipeline_mode<synchronous>, transform_indices = @transform_0, window_bounds = array<i64: 4, 32>}, {transform_indices = @transform_1, window_bounds = array<i64: 50, 32>}, {transform_indices = @transform_2, window_bounds = array<i64: 4, 50>}]} {
    %c0 = arith.constant 0 : index
    %c0_0 = arith.constant 0 : index
    %0 = vector.load %arg1[%c0, %c0_0] : memref<4x32xf32, #tpu.memory_space<vmem>>, vector<4x32xf32>
    %c0_1 = arith.constant 0 : index
    %c0_2 = arith.constant 0 : index
    %1 = vector.load %arg2[%c0_1, %c0_2] : memref<50x32xf32, #tpu.memory_space<vmem>>, vector<50x32xf32>
    %cst = arith.constant dense<0.000000e+00> : vector<4x50xf32>
    %2 = tpu.matmul %0, %1, %cst {dimension_numbers = #tpu.dot_dimension_numbers<[1], [1], [0], [0], [0, 0, 1, 0], [], []>} : vector<4x32xf32>, vector<50x32xf32>, vector<4x50xf32> -> vector<4x50xf32>
    %c0_3 = arith.constant 0 : index
    %c0_4 = arith.constant 0 : index
    %3 = vector.load %arg3[%c0_3, %c0_4] : memref<4x50xf32, #tpu.memory_space<vmem>>, vector<4x50xf32>
    tpu.vector_store %arg3[%c0_3, %c0_4], %2 {strides = array<i32>} : memref<4x50xf32, #tpu.memory_space<vmem>>, vector<4x50xf32>,
    return
  }
  func.func @transform_0(%arg0: i32) -> (i32, i32) {
    %c0_i32 = arith.constant 0 : i32
    %c0_i32_0 = arith.constant 0 : i32
    %c0_i32_1 = arith.constant 0 : i32
    return %c0_i32, %c0_i32_0 : i32, i32
  }
  func.func @transform_1(%arg0: i32) -> (i32, i32) {
    %c0_i32 = arith.constant 0 : i32
    %c0_i32_0 = arith.constant 0 : i32
    return %arg0, %c0_i32 : i32, i32
  }
  func.func @transform_2(%arg0: i32) -> (i32, i32) {
    %c0_i32 = arith.constant 0 : i32
    %c0_i32_0 = arith.constant 0 : i32
    return %c0_i32, %arg0 : i32, i32
  }
}

</mosaic_0001>

<llo_original>
// kernel: piecl_forward.5
$region0: #{piecl_forward.5}
  #allocation0 [shape = 'u32[]', space=smem, size = 0x4, offset = 0x4, fixed_abs, tag = 'smem constant byte address 0x4 - core index']
  #allocation1 [shape = 'u32[144,128]{1,0:T(1,128)}', space=vmem, size = 0x12000, scoped, tag = 'internal scratch']
  %s0 = inlined_call_operand.vmem [shape: f32[4,32], index: 0, kind: input, shape index: {}]
  %s1 = inlined_call_operand.vmem [shape: f32[50,32], index: 1, kind: input, shape index: {}]
  %s2 = inlined_call_operand.vmem [shape: f32[4,50], index: 2, kind: output, shape index: {}]
  %s3 = sld [smem:[#allocation0]]
  $region18: #{piecl_forward.5} parent=0
    _
  %s5 = ssub.s32 1, %s3
  %s6 = scalar_select 0, %s5, %s3
  // Predicated region
  $region2: #{piecl_forward.5} parent=0 // pred_check
    _
  $region3: #{piecl_forward.5} parent=0 // pred_check_branch
    %8 = sbr.rel (0) target = $region5
  $region4: #{piecl_forward.5} parent=0 // pred_region
    _
  $region5: #{piecl_forward.5} parent=0 // pred_fallthru
    _
  // Predicated region
  $region6: #{piecl_forward.5} parent=0 // pred_check
    _
  $region7: #{piecl_forward.5} parent=0 // pred_check_branch
    %10 = sbr.rel (0) target = $region9
  $region8: #{piecl_forward.5} parent=0 // pred_region
    _
  $region9: #{piecl_forward.5} parent=0 // pred_fallthru
    _
  %v11 = vld [vmem:[%s0] sm:$0xf]
  %v12 = vld [vmem:[%s1] sm:$0xff]
  %v13 = vld [vmem:[%s1 + $0x8] sm:$0xff]
  %v14 = vld [vmem:[%s1 + $0x10] sm:$0xff]
  %v15 = vld [vmem:[%s1 + $0x18] sm:$0xff]
  %v16 = vld [vmem:[%s1 + $0x20] sm:$0xff]
  %v17 = vld [vmem:[%s1 + $0x28] sm:$0xff]
  %v18 = vld [vmem:[%s1 + $0x30] sm:$0x3]
  %vm19 = vcmask 261120
  %v21 = vsel %vm19, %v11, 0
  %v24 = vsel %vm19, %v12, 0
  %v27 = vsel %vm19, %v13, 0
  %v30 = vsel %vm19, %v14, 0
  %v33 = vsel %vm19, %v15, 0
  %v36 = vsel %vm19, %v16, 0
  %v39 = vsel %vm19, %v17, 0
  %v42 = vsel %vm19, %v18, 0
  %44 = vmatprep.subr.mxu0 0.0
  %45 = vmatpush1.xpose.msra.mxu0 %v24
  %46 = vmatprep.subr.mxu0 0.0
  %47 = vmatpush1.xpose.msra.mxu0 %v27
  %48 = vmatprep.subr.mxu0 0.0
  %49 = vmatpush1.xpose.msra.mxu0 %v30
  %50 = vmatprep.subr.mxu0 0.0
  %51 = vmatpush1.xpose.msra.mxu0 %v33
  %52 = vmatprep.subr.mxu0 0.0
  %53 = vmatpush1.xpose.msra.mxu0 %v36
  %54 = vmatprep.subr.mxu0 0.0
  %55 = vmatpush1.xpose.msra.mxu0 %v39
  %56 = vmatprep.subr.mxu0 0.0
  %57 = vmatpush1.xpose.msra.mxu0 %v42
  %58 = vmatprep.subr.mxu0 0.0
  %59 = vmatpush1.xpose.msra.mxu0 0.0
  %60 = vmatprep.subr.mxu0 0.0
  %61 = vmatpush1.xpose.msra.mxu0 0.0
  %62 = vmatprep.subr.mxu0 0.0
  %63 = vmatpush1.xpose.msra.mxu0 0.0
  %64 = vmatprep.subr.mxu0 0.0
  %65 = vmatpush1.xpose.msra.mxu0 0.0
  %66 = vmatprep.subr.mxu0 0.0
  %67 = vmatpush1.xpose.msra.mxu0 0.0
  %68 = vmatprep.subr.mxu0 0.0
  %69 = vmatpush1.xpose.msra.mxu0 0.0
  %70 = vmatprep.subr.mxu0 0.0
  %71 = vmatpush1.xpose.msra.mxu0 0.0
  %72 = vmatprep.subr.mxu0 0.0
  %73 = vmatpush1.xpose.msra.mxu0 0.0
  %74 = vmatprep.subr.mxu0 0.0
  %75 = vmatpush1.xpose.msra.mxu0 0.0
  %76 = vmatprep.subr.mxu0 0.0
  %77 = vmatpush1.xpose.msra.mxu0 0.0
  %78 = vmatprep.subr.mxu0 0.0
  %79 = vmatpush1.xpose.msra.mxu0 0.0
  %80 = vmatprep.subr.mxu0 0.0
  %81 = vmatpush1.xpose.msra.mxu0 0.0
  %82 = vmatprep.subr.mxu0 0.0
  %83 = vmatpush1.xpose.msra.mxu0 0.0
  %84 = vmatprep.subr.mxu0 0.0
  %85 = vmatpush1.xpose.msra.mxu0 0.0
  %86 = vmatprep.subr.mxu0 0.0
  %87 = vmatpush1.xpose.msra.mxu0 0.0
  %88 = vmatprep.subr.mxu0 0.0
  %89 = vmatpush1.xpose.msra.mxu0 0.0
  %90 = vmatprep.subr.mxu0 0.0
  %91 = vmatpush1.xpose.msra.mxu0 0.0
  %92 = vmatprep.subr.mxu0 0.0
  %93 = vmatpush1.xpose.msra.mxu0 0.0
  %94 = vmatprep.subr.mxu0 0.0
  %95 = vmatpush1.xpose.msra.mxu0 0.0
  %96 = vmatprep.subr.mxu0 0.0
  %97 = vmatpush1.xpose.msra.mxu0 0.0
  %98 = vmatprep.subr.mxu0 0.0
  %99 = vmatpush1.xpose.msra.mxu0 0.0
  %100 = vmatprep.subr.mxu0 0.0
  %101 = vmatpush1.xpose.msra.mxu0 0.0
  %102 = vmatprep.subr.mxu0 0.0
  %103 = vmatpush1.xpose.msra.mxu0 0.0
  %104 = vmatprep.subr.mxu0 0.0
  %105 = vmatpush1.xpose.msra.mxu0 0.0
  %106 = vmatprep.subr.mxu0 0.0
  %107 = vmatpush1.xpose.msra.mxu0 0.0
  %108 = vmatprep.mubr.f32.mxu0 0.0
  %109 = vmatmul.mubr.f32.gmra.mrb[0].mxu0 %v21
  %v110 = vpop.f32.mrb[0].mxu0
  %v111 = vadd.f32 0.0, %v110
  %v112 = vpop.f32.mrb[0].mxu0
  %113 = vdwg.mxu0
  %vm114 = vcmask 404480
  %115 = vst.msk [vmem:[%s2] sm:$0xf] %vm114, %v111
  // Predicated region
  $region10: #{piecl_forward.5} parent=0 // pred_check
    _
  $region11: #{piecl_forward.5} parent=0 // pred_check_branch
    %117 = sbr.rel (0) target = $region13
  $region12: #{piecl_forward.5} parent=0 // pred_region
    _
  $region13: #{piecl_forward.5} parent=0 // pred_fallthru
    _
  // Predicated region
  $region14: #{piecl_forward.5} parent=0 // pred_check
    _
  $region15: #{piecl_forward.5} parent=0 // pred_check_branch
    %119 = sbr.rel (0) target = $region17
  $region16: #{piecl_forward.5} parent=0 // pred_region
    _
  $region17: #{piecl_forward.5} parent=0 // pred_fallthru
    _

// kernel: piecl_forward.4
$region0: #{piecl_forward.4}
  #allocation0 [shape = 'u32[]', space=smem, size = 0x4, offset = 0x4, fixed_abs, tag = 'smem constant byte address 0x4 - core index']
  #allocation1 [shape = 'u32[144,128]{1,0:T(1,128)}', space=vmem, size = 0x12000, scoped, tag = 'internal scratch']
  %s0 = inlined_call_operand.vmem [shape: f32[4,64], index: 0, kind: input, shape index: {}]
  %s1 = inlined_call_operand.vmem [shape: f32[64,32], index: 1, kind: input, shape index: {}]
  %s2 = inlined_call_operand.vmem [shape: f32[1,32], index: 2, kind: input, shape index: {}]
  %s3 = inlined_call_operand.vmem [shape: f32[4,32], index: 3, kind: input, shape index: {}]
  %s4 = inlined_call_operand.vmem [shape: f32[4,4], index: 4, kind: input, shape index: {}]
  %s5 = inlined_call_operand.vmem [shape: f32[4,32], index: 5, kind: output, shape index: {0}]
  %s6 = inlined_call_operand.vmem [shape: f32[4,2], index: 6, kind: output, shape index: {1}]
  %7 = xla_tuple %s5, %s6
  %s8 = sld [smem:[#allocation0]]
  $region38: #{piecl_forward.4} parent=0
    _
  %s10 = ssub.s32 1, %s8
  %s11 = scalar_select 0, %s10, %s8
  // Predicated region
  $region2: #{piecl_forward.4} parent=0 // pred_check
    _
  $region3: #{piecl_forward.4} parent=0 // pred_check_branch
    %13 = sbr.rel (0) target = $region5
  $region4: #{piecl_forward.4} parent=0 // pred_region
    _
  $region5: #{piecl_forward.4} parent=0 // pred_fallthru
    _
  // Predicated region
  $region6: #{piecl_forward.4} parent=0 // pred_check
    _
  $region7: #{piecl_forward.4} parent=0 // pred_check_branch
    %15 = sbr.rel (0) target = $region9
  $region8: #{piecl_forward.4} parent=0 // pred_region
    _
  $region9: #{piecl_forward.4} parent=0 // pred_fallthru
    _
  // Predicated region
  $region10: #{piecl_forward.4} parent=0 // pred_check
    _
  $region11: #{piecl_forward.4} parent=0 // pred_check_branch
    %17 = sbr.rel (0) target = $region13
  $region12: #{piecl_forward.4} parent=0 // pred_region
    _
  $region13: #{piecl_forward.4} parent=0 // pred_fallthru
    _
  // Predicated region
  $region14: #{piecl_forward.4} parent=0 // pred_check
    _
  $region15: #{piecl_forward.4} parent=0 // pred_check_branch
    %19 = sbr.rel (0) target = $region17
  $region16: #{piecl_forward.4} parent=0 // pred_region
    _
  $region17: #{piecl_forward.4} parent=0 // pred_fallthru
    _
  // Predicated region
  $region18: #{piecl_forward.4} parent=0 // pred_check
    _
  $region19: #{piecl_forward.4} parent=0 // pred_check_branch
    %21 = sbr.rel (0) target = $region21
  $region20: #{piecl_forward.4} parent=0 // pred_region
    _
  $region21: #{piecl_forward.4} parent=0 // pred_fallthru
    _
  %v22 = vld [vmem:[%s0] sm:$0xf]
  %v23 = vld [vmem:[%s1] sm:$0xff]
  %v24 = vld [vmem:[%s1 + $0x8] sm:$0xff]
  %v25 = vld [vmem:[%s1 + $0x10] sm:$0xff]
  %v26 = vld [vmem:[%s1 + $0x18] sm:$0xff]
  %v27 = vld [vmem:[%s1 + $0x20] sm:$0xff]
  %v28 = vld [vmem:[%s1 + $0x28] sm:$0xff]
  %v29 = vld [vmem:[%s1 + $0x30] sm:$0xff]
  %v30 = vld [vmem:[%s1 + $0x38] sm:$0xff]
  %v31 = vld [vmem:[%s2] sm:$0x1]
  %v33 = vlaneseq
  %v34 = vshrl.u32 %v33, 7
  %v35 = vsub.s32 0, %v34
  %v36 = vrot.slane %v31, %v35
  %vm38 = vcmask 523264
  %v40 = vsel %vm38, %v22, 0
  %42 = vmatprep.subr.mxu0 0.0
  %43 = vmatpush1.msra.mxu0 %v23
  %44 = vmatprep.subr.mxu0 0.0
  %45 = vmatpush1.msra.mxu0 %v24
  %46 = vmatprep.subr.mxu0 0.0
  %47 = vmatpush1.msra.mxu0 %v25
  %48 = vmatprep.subr.mxu0 0.0
  %49 = vmatpush1.msra.mxu0 %v26
  %50 = vmatprep.subr.mxu0 0.0
  %51 = vmatpush1.msra.mxu0 %v27
  %52 = vmatprep.subr.mxu0 0.0
  %53 = vmatpush1.msra.mxu0 %v28
  %54 = vmatprep.subr.mxu0 0.0
  %55 = vmatpush1.msra.mxu0 %v29
  %56 = vmatprep.subr.mxu0 0.0
  %57 = vmatpush1.msra.mxu0 %v30
  %58 = vmatprep.subr.mxu0 0.0
  %59 = vmatpush1.msra.mxu0 0.0
  %60 = vmatprep.subr.mxu0 0.0
  %61 = vmatpush1.msra.mxu0 0.0
  %62 = vmatprep.subr.mxu0 0.0
  %63 = vmatpush1.msra.mxu0 0.0
  %64 = vmatprep.subr.mxu0 0.0
  %65 = vmatpush1.msra.mxu0 0.0
  %66 = vmatprep.subr.mxu0 0.0
  %67 = vmatpush1.msra.mxu0 0.0
  %68 = vmatprep.subr.mxu0 0.0
  %69 = vmatpush1.msra.mxu0 0.0
  %70 = vmatprep.subr.mxu0 0.0
  %71 = vmatpush1.msra.mxu0 0.0
  %72 = vmatprep.subr.mxu0 0.0
  %73 = vmatpush1.msra.mxu0 0.0
  %74 = vmatprep.subr.mxu0 0.0
  %75 = vmatpush1.msra.mxu0 0.0
  %76 = vmatprep.subr.mxu0 0.0
  %77 = vmatpush1.msra.mxu0 0.0
  %78 = vmatprep.subr.mxu0 0.0
  %79 = vmatpush1.msra.mxu0 0.0
  %80 = vmatprep.subr.mxu0 0.0
  %81 = vmatpush1.msra.mxu0 0.0
  %82 = vmatprep.subr.mxu0 0.0
  %83 = vmatpush1.msra.mxu0 0.0
  %84 = vmatprep.subr.mxu0 0.0
  %85 = vmatpush1.msra.mxu0 0.0
  %86 = vmatprep.subr.mxu0 0.0
  %87 = vmatpush1.msra.mxu0 0.0
  %88 = vmatprep.subr.mxu0 0.0
  %89 = vmatpush1.msra.mxu0 0.0
  %90 = vmatprep.subr.mxu0 0.0
  %91 = vmatpush1.msra.mxu0 0.0
  %92 = vmatprep.subr.mxu0 0.0
  %93 = vmatpush1.msra.mxu0 0.0
  %94 = vmatprep.subr.mxu0 0.0
  %95 = vmatpush1.msra.mxu0 0.0
  %96 = vmatprep.subr.mxu0 0.0
  %97 = vmatpush1.msra.mxu0 0.0
  %98 = vmatprep.subr.mxu0 0.0
  %99 = vmatpush1.msra.mxu0 0.0
  %100 = vmatprep.subr.mxu0 0.0
  %101 = vmatpush1.msra.mxu0 0.0
  %102 = vmatprep.subr.mxu0 0.0
  %103 = vmatpush1.msra.mxu0 0.0
  %104 = vmatprep.subr.mxu0 0.0
  %105 = vmatpush1.msra.mxu0 0.0
  %106 = vmatprep.mubr.f32.mxu0 0.0
  %107 = vmatmul.mubr.f32.gmra.mrb[0].mxu0 %v40
  %v108 = vpop.f32.mrb[0].mxu0
  %v109 = vadd.f32 %v36, %v108
  %v110 = vpop.f32.mrb[0].mxu0
  %111 = vdwg.mxu0
  %vm112 = vcmask 257024
  %113 = vst.msk [vmem:[%s5] sm:$0xf] %vm112, %v109
  %v114 = vld [vmem:[%s3] sm:$0xf]
  %vm115 = vcmask 261120
  %v117 = vsel %vm115, %v114, 0
  %v120 = vsel %vm115, %v109, 0
  %122 = vmatprep.subr.mxu0 0.0
  %123 = vmatpush1.xpose.msra.mxu0 %v120
  %124 = vmatprep.subr.mxu0 0.0
  %125 = vmatpush1.xpose.msra.mxu0 0.0
  %126 = vmatprep.subr.mxu0 0.0
  %127 = vmatpush1.xpose.msra.mxu0 0.0
  %128 = vmatprep.subr.mxu0 0.0
  %129 = vmatpush1.xpose.msra.mxu0 0.0
  %130 = vmatprep.subr.mxu0 0.0
  %131 = vmatpush1.xpose.msra.mxu0 0.0
  %132 = vmatprep.subr.mxu0 0.0
  %133 = vmatpush1.xpose.msra.mxu0 0.0
  %134 = vmatprep.subr.mxu0 0.0
  %135 = vmatpush1.xpose.msra.mxu0 0.0
  %136 = vmatprep.subr.mxu0 0.0
  %137 = vmatpush1.xpose.msra.mxu0 0.0
  %138 = vmatprep.subr.mxu0 0.0
  %139 = vmatpush1.xpose.msra.mxu0 0.0
  %140 = vmatprep.subr.mxu0 0.0
  %141 = vmatpush1.xpose.msra.mxu0 0.0
  %142 = vmatprep.subr.mxu0 0.0
  %143 = vmatpush1.xpose.msra.mxu0 0.0
  %144 = vmatprep.subr.mxu0 0.0
  %145 = vmatpush1.xpose.msra.mxu0 0.0
  %146 = vmatprep.subr.mxu0 0.0
  %147 = vmatpush1.xpose.msra.mxu0 0.0
  %148 = vmatprep.subr.mxu0 0.0
  %149 = vmatpush1.xpose.msra.mxu0 0.0
  %150 = vmatprep.subr.mxu0 0.0
  %151 = vmatpush1.xpose.msra.mxu0 0.0
  %152 = vmatprep.subr.mxu0 0.0
  %153 = vmatpush1.xpose.msra.mxu0 0.0
  %154 = vmatprep.subr.mxu0 0.0
  %155 = vmatpush1.xpose.msra.mxu0 0.0
  %156 = vmatprep.subr.mxu0 0.0
  %157 = vmatpush1.xpose.msra.mxu0 0.0
  %158 = vmatprep.subr.mxu0 0.0
  %159 = vmatpush1.xpose.msra.mxu0 0.0
  %160 = vmatprep.subr.mxu0 0.0
  %161 = vmatpush1.xpose.msra.mxu0 0.0
  %162 = vmatprep.subr.mxu0 0.0
  %163 = vmatpush1.xpose.msra.mxu0 0.0
  %164 = vmatprep.subr.mxu0 0.0
  %165 = vmatpush1.xpose.msra.mxu0 0.0
  %166 = vmatprep.subr.mxu0 0.0
  %167 = vmatpush1.xpose.msra.mxu0 0.0
  %168 = vmatprep.subr.mxu0 0.0
  %169 = vmatpush1.xpose.msra.mxu0 0.0
  %170 = vmatprep.subr.mxu0 0.0
  %171 = vmatpush1.xpose.msra.mxu0 0.0
  %172 = vmatprep.subr.mxu0 0.0
  %173 = vmatpush1.xpose.msra.mxu0 0.0
  %174 = vmatprep.subr.mxu0 0.0
  %175 = vmatpush1.xpose.msra.mxu0 0.0
  %176 = vmatprep.subr.mxu0 0.0
  %177 = vmatpush1.xpose.msra.mxu0 0.0
  %178 = vmatprep.subr.mxu0 0.0
  %179 = vmatpush1.xpose.msra.mxu0 0.0
  %180 = vmatprep.subr.mxu0 0.0
  %181 = vmatpush1.xpose.msra.mxu0 0.0
  %182 = vmatprep.subr.mxu0 0.0
  %183 = vmatpush1.xpose.msra.mxu0 0.0
  %184 = vmatprep.subr.mxu0 0.0
  %185 = vmatpush1.xpose.msra.mxu0 0.0
  %186 = vmatprep.mubr.f32.mxu0 0.0
  %187 = vmatmul.mubr.f32.gmra.mrb[0].mxu0 %v117
  %v188 = vpop.f32.mrb[0].mxu0
  %v189 = vadd.f32 0.0, %v188
  %v190 = vpop.f32.mrb[0].mxu0
  %191 = vdwg.mxu0
  %v192 = vld [vmem:[%s4] sm:$0xf]
  %v193 = vmul.f32 %v189, %v192
  %vm194 = vcmask 27648
  %v195 = vsel %vm194, %v193, 0.0
  %196 = vadd.xlane.f32.xlu0 %v195
  %v197 = vpop.xlane.xlu0 %196
  %v198 = vmul.f32 %v197, 0.25
  %v199 = vsub.f32 1.0, %v192
  %v200 = vmul.f32 %v189, %v199
  %v201 = vsel %vm194, %v200, 0.0
  %202 = vadd.xlane.f32.xlu0 %v201
  %v203 = vpop.xlane.xlu0 %202
  %v204 = vmul.f32 %v203, 0.25
  %vm205 = vcmask 7168
  %v206 = vsel %vm205, %v198, %v204
  %vm207 = vcmask 11264
  %208 = vst.msk [vmem:[%s6] sm:$0xf] %vm207, %v206
  // Predicated region
  $region22: #{piecl_forward.4} parent=0 // pred_check
    _
  $region23: #{piecl_forward.4} parent=0 // pred_check_branch
    %210 = sbr.rel (0) target = $region25
  $region24: #{piecl_forward.4} parent=0 // pred_region
    _
  $region25: #{piecl_forward.4} parent=0 // pred_fallthru
    _
  // Predicated region
  $region26: #{piecl_forward.4} parent=0 // pred_check
    _
  $region27: #{piecl_forward.4} parent=0 // pred_check_branch
    %212 = sbr.rel (0) target = $region29
  $region28: #{piecl_forward.4} parent=0 // pred_region
    _
  $region29: #{piecl_forward.4} parent=0 // pred_fallthru
    _
  // Predicated region
  $region30: #{piecl_forward.4} parent=0 // pred_check
    _
  $region31: #{piecl_forward.4} parent=0 // pred_check_branch
    %214 = sbr.rel (0) target = $region33
  $region32: #{piecl_forward.4} parent=0 // pred_region
    _
  $region33: #{piecl_forward.4} parent=0 // pred_fallthru
    _
  // Predicated region
  $region34: #{piecl_forward.4} parent=0 // pred_check
    _
  $region35: #{piecl_forward.4} parent=0 // pred_check_branch
    %216 = sbr.rel (0) target = $region37
  $region36: #{piecl_forward.4} parent=0 // pred_region
    _
  $region37: #{piecl_forward.4} parent=0 // pred_fallthru
    _

// kernel: piecl_forward.3
$region0: #{piecl_forward.3}
  #allocation0 [shape = 'u32[]', space=smem, size = 0x4, offset = 0x4, fixed_abs, tag = 'smem constant byte address 0x4 - core index']
  #allocation1 [shape = 'u32[144,128]{1,0:T(1,128)}', space=vmem, size = 0x12000, scoped, tag = 'internal scratch']
  %s0 = inlined_call_operand.vmem [shape: f32[4,8,32], index: 0, kind: input, shape index: {}]
  %s1 = inlined_call_operand.vmem [shape: f32[4,8], index: 1, kind: input, shape index: {}]
  %s2 = inlined_call_operand.vmem [shape: f32[8,8], index: 2, kind: input, shape index: {}]
  %s3 = inlined_call_operand.vmem [shape: f32[32,128], index: 3, kind: input, shape index: {}]
  %s4 = inlined_call_operand.vmem [shape: f32[32,128], index: 4, kind: input, shape index: {}]
  %s5 = inlined_call_operand.vmem [shape: f32[4,32], index: 5, kind: output, shape index: {0}]
  %s6 = inlined_call_operand.hbm [shape: f32[4,8,8], index: 6, kind: output, shape index: {1}]
  %7 = xla_tuple %s5, %s6
  %s8 = sld [smem:[#allocation0]]
  $region38: #{piecl_forward.3} parent=0
    _
  %s10 = ssub.s32 1, %s8
  %s11 = scalar_select 0, %s10, %s8
  $region1: #{piecl_forward.3} parent=0
    #allocation2 [shape = 'u8[16384]{0}', space=vmem, size = 0x4000, scoped, tag = 'output window, operand 1, single buffered']
    #allocation3 [shape = 's32[1]{0}', space=sflag, size = 0x4, scoped, tag = 'scoped memory for piecl_forward.3']
    %12 = vsyncpa [#allocation3], 0
    // Predicated region
    $region2: #{piecl_forward.3} parent=1 // pred_check
      _
    $region3: #{piecl_forward.3} parent=1 // pred_check_branch
      %14 = sbr.rel (0) target = $region5
    $region4: #{piecl_forward.3} parent=1 // pred_region
      _
    $region5: #{piecl_forward.3} parent=1 // pred_fallthru
      _
    // Predicated region
    $region6: #{piecl_forward.3} parent=1 // pred_check
      _
    $region7: #{piecl_forward.3} parent=1 // pred_check_branch
      %16 = sbr.rel (0) target = $region9
    $region8: #{piecl_forward.3} parent=1 // pred_region
      _
    $region9: #{piecl_forward.3} parent=1 // pred_fallthru
      _
    // Predicated region
    $region10: #{piecl_forward.3} parent=1 // pred_check
      _
    $region11: #{piecl_forward.3} parent=1 // pred_check_branch
      %18 = sbr.rel (0) target = $region13
    $region12: #{piecl_forward.3} parent=1 // pred_region
      _
    $region13: #{piecl_forward.3} parent=1 // pred_fallthru
      _
    // Predicated region
    $region14: #{piecl_forward.3} parent=1 // pred_check
      _
    $region15: #{piecl_forward.3} parent=1 // pred_check_branch
      %20 = sbr.rel (0) target = $region17
    $region16: #{piecl_forward.3} parent=1 // pred_region
      _
    $region17: #{piecl_forward.3} parent=1 // pred_fallthru
      _
    // Predicated region
    $region18: #{piecl_forward.3} parent=1 // pred_check
      _
    $region19: #{piecl_forward.3} parent=1 // pred_check_branch
      %22 = sbr.rel (0) target = $region21
    $region20: #{piecl_forward.3} parent=1 // pred_region
      _
    $region21: #{piecl_forward.3} parent=1 // pred_fallthru
      _
    %v23 = vld [vmem:[%s0] sm:$0xff]
    %v24 = vld [vmem:[%s0 + $0x8] sm:$0xff]
    %v25 = vld [vmem:[%s0 + $0x10] sm:$0xff]
    %v26 = vld [vmem:[%s0 + $0x18] sm:$0xff]
    %v27 = vld [vmem:[%s1] sm:$0xf]
    %v28 = vld [vmem:[%s2] sm:$0xff]
    %v29 = vld [vmem:[%s3] sm:$0xff]
    %v30 = vld [vmem:[%s3 + $0x8] sm:$0xff]
    %v31 = vld [vmem:[%s3 + $0x10] sm:$0xff]
    %v32 = vld [vmem:[%s3 + $0x18] sm:$0xff]
    %v33 = vld [vmem:[%s4] sm:$0xff]
    %v34 = vld [vmem:[%s4 + $0x8] sm:$0xff]
    %v35 = vld [vmem:[%s4 + $0x10] sm:$0xff]
    %v36 = vld [vmem:[%s4 + $0x18] sm:$0xff]
    %vm37 = vcmask 261120
    %v39 = vsel %vm37, %v23, 0
    %v42 = vsel %vm37, %v24, 0
    %v45 = vsel %vm37, %v25, 0
    %v48 = vsel %vm37, %v26, 0
    %50 = vmatprep.subr.mxu0 0.0
    %51 = vmatpush1.msra.mxu0 %v29
    %52 = vmatprep.subr.mxu0 0.0
    %53 = vmatpush1.msra.mxu0 %v30
    %54 = vmatprep.subr.mxu0 0.0
    %55 = vmatpush1.msra.mxu0 %v31
    %56 = vmatprep.subr.mxu0 0.0
    %57 = vmatpush1.msra.mxu0 %v32
    %58 = vmatprep.subr.mxu0 0.0
    %59 = vmatpush1.msra.mxu0 0.0
    %60 = vmatprep.subr.mxu0 0.0
    %61 = vmatpush1.msra.mxu0 0.0
    %62 = vmatprep.subr.mxu0 0.0
    %63 = vmatpush1.msra.mxu0 0.0
    %64 = vmatprep.subr.mxu0 0.0
    %65 = vmatpush1.msra.mxu0 0.0
    %66 = vmatprep.subr.mxu0 0.0
    %67 = vmatpush1.msra.mxu0 0.0
    %68 = vmatprep.subr.mxu0 0.0
    %69 = vmatpush1.msra.mxu0 0.0
    %70 = vmatprep.subr.mxu0 0.0
    %71 = vmatpush1.msra.mxu0 0.0
    %72 = vmatprep.subr.mxu0 0.0
    %73 = vmatpush1.msra.mxu0 0.0
    %74 = vmatprep.subr.mxu0 0.0
    %75 = vmatpush1.msra.mxu0 0.0
    %76 = vmatprep.subr.mxu0 0.0
    %77 = vmatpush1.msra.mxu0 0.0
    %78 = vmatprep.subr.mxu0 0.0
    %79 = vmatpush1.msra.mxu0 0.0
    %80 = vmatprep.subr.mxu0 0.0
    %81 = vmatpush1.msra.mxu0 0.0
    %82 = vmatprep.subr.mxu0 0.0
    %83 = vmatpush1.msra.mxu0 0.0
    %84 = vmatprep.subr.mxu0 0.0
    %85 = vmatpush1.msra.mxu0 0.0
    %86 = vmatprep.subr.mxu0 0.0
    %87 = vmatpush1.msra.mxu0 0.0
    %88 = vmatprep.subr.mxu0 0.0
    %89 = vmatpush1.msra.mxu0 0.0
    %90 = vmatprep.subr.mxu0 0.0
    %91 = vmatpush1.msra.mxu0 0.0
    %92 = vmatprep.subr.mxu0 0.0
    %93 = vmatpush1.msra.mxu0 0.0
    %94 = vmatprep.subr.mxu0 0.0
    %95 = vmatpush1.msra.mxu0 0.0
    %96 = vmatprep.subr.mxu0 0.0
    %97 = vmatpush1.msra.mxu0 0.0
    %98 = vmatprep.subr.mxu0 0.0
    %99 = vmatpush1.msra.mxu0 0.0
    %100 = vmatprep.subr.mxu0 0.0
    %101 = vmatpush1.msra.mxu0 0.0
    %102 = vmatprep.subr.mxu0 0.0
    %103 = vmatpush1.msra.mxu0 0.0
    %104 = vmatprep.subr.mxu0 0.0
    %105 = vmatpush1.msra.mxu0 0.0
    %106 = vmatprep.subr.mxu0 0.0
    %107 = vmatpush1.msra.mxu0 0.0
    %108 = vmatprep.subr.mxu0 0.0
    %109 = vmatpush1.msra.mxu0 0.0
    %110 = vmatprep.subr.mxu0 0.0
    %111 = vmatpush1.msra.mxu0 0.0
    %112 = vmatprep.subr.mxu0 0.0
    %113 = vmatpush1.msra.mxu0 0.0
    %114 = vmatprep.mubr.f32.mxu0 0.0
    %115 = vmatmul.mubr.f32.gmra.mrb[0].mxu0 %v39
    %v116 = vpop.f32.mrb[0].mxu0
    %v117 = vadd.f32 0.0, %v116
    %v118 = vpop.f32.mrb[0].mxu0
    %119 = vmatprep.mubr.f32.mxu0 0.0
    %120 = vmatmul.mubr.f32.gmra.mrb[0].mxu0 %v42
    %v121 = vpop.f32.mrb[0].mxu0
    %v122 = vadd.f32 0.0, %v121
    %v123 = vpop.f32.mrb[0].mxu0
    %124 = vmatprep.mubr.f32.mxu0 0.0
    %125 = vmatmul.mubr.f32.gmra.mrb[0].mxu0 %v45
    %v126 = vpop.f32.mrb[0].mxu0
    %v127 = vadd.f32 0.0, %v126
    %v128 = vpop.f32.mrb[0].mxu0
    %129 = vmatprep.mubr.f32.mxu0 0.0
    %130 = vmatmul.mubr.f32.gmra.mrb[0].mxu0 %v48
    %v131 = vpop.f32.mrb[0].mxu0
    %v132 = vadd.f32 0.0, %v131
    %v133 = vpop.f32.mrb[0].mxu0
    %134 = vdwg.mxu0
    %v135 = vtanh.pop %v117
    %v136 = vtanh.pop %v122
    %v137 = vtanh.pop %v127
    %v138 = vtanh.pop %v132
    %139 = vmatprep.subr.mxu0 0.0
    %140 = vmatpush1.msra.mxu0 %v33
    %141 = vmatprep.subr.mxu0 0.0
    %142 = vmatpush1.msra.mxu0 %v34
    %143 = vmatprep.subr.mxu0 0.0
    %144 = vmatpush1.msra.mxu0 %v35
    %145 = vmatprep.subr.mxu0 0.0
    %146 = vmatpush1.msra.mxu0 %v36
    %147 = vmatprep.subr.mxu0 0.0
    %148 = vmatpush1.msra.mxu0 0.0
    %149 = vmatprep.subr.mxu0 0.0
    %150 = vmatpush1.msra.mxu0 0.0
    %151 = vmatprep.subr.mxu0 0.0
    %152 = vmatpush1.msra.mxu0 0.0
    %153 = vmatprep.subr.mxu0 0.0
    %154 = vmatpush1.msra.mxu0 0.0
    %155 = vmatprep.subr.mxu0 0.0
    %156 = vmatpush1.msra.mxu0 0.0
    %157 = vmatprep.subr.mxu0 0.0
    %158 = vmatpush1.msra.mxu0 0.0
    %159 = vmatprep.subr.mxu0 0.0
    %160 = vmatpush1.msra.mxu0 0.0
    %161 = vmatprep.subr.mxu0 0.0
    %162 = vmatpush1.msra.mxu0 0.0
    %163 = vmatprep.subr.mxu0 0.0
    %164 = vmatpush1.msra.mxu0 0.0
    %165 = vmatprep.subr.mxu0 0.0
    %166 = vmatpush1.msra.mxu0 0.0
    %167 = vmatprep.subr.mxu0 0.0
    %168 = vmatpush1.msra.mxu0 0.0
    %169 = vmatprep.subr.mxu0 0.0
    %170 = vmatpush1.msra.mxu0 0.0
    %171 = vmatprep.subr.mxu0 0.0
    %172 = vmatpush1.msra.mxu0 0.0
    %173 = vmatprep.subr.mxu0 0.0
    %174 = vmatpush1.msra.mxu0 0.0
    %175 = vmatprep.subr.mxu0 0.0
    %176 = vmatpush1.msra.mxu0 0.0
    %177 = vmatprep.subr.mxu0 0.0
    %178 = vmatpush1.msra.mxu0 0.0
    %179 = vmatprep.subr.mxu0 0.0
    %180 = vmatpush1.msra.mxu0 0.0
    %181 = vmatprep.subr.mxu0 0.0
    %182 = vmatpush1.msra.mxu0 0.0
    %183 = vmatprep.subr.mxu0 0.0
    %184 = vmatpush1.msra.mxu0 0.0
    %185 = vmatprep.subr.mxu0 0.0
    %186 = vmatpush1.msra.mxu0 0.0
    %187 = vmatprep.subr.mxu0 0.0
    %188 = vmatpush1.msra.mxu0 0.0
    %189 = vmatprep.subr.mxu0 0.0
    %190 = vmatpush1.msra.mxu0 0.0
    %191 = vmatprep.subr.mxu0 0.0
    %192 = vmatpush1.msra.mxu0 0.0
    %193 = vmatprep.subr.mxu0 0.0
    %194 = vmatpush1.msra.mxu0 0.0
    %195 = vmatprep.subr.mxu0 0.0
    %196 = vmatpush1.msra.mxu0 0.0
    %197 = vmatprep.subr.mxu0 0.0
    %198 = vmatpush1.msra.mxu0 0.0
    %199 = vmatprep.subr.mxu0 0.0
    %200 = vmatpush1.msra.mxu0 0.0
    %201 = vmatprep.subr.mxu0 0.0
    %202 = vmatpush1.msra.mxu0 0.0
    %203 = vmatprep.mubr.f32.mxu0 0.0
    %204 = vmatmul.mubr.f32.gmra.mrb[0].mxu0 %v39
    %v205 = vpop.f32.mrb[0].mxu0
    %v206 = vadd.f32 0.0, %v205
    %v207 = vpop.f32.mrb[0].mxu0
    %208 = vmatprep.mubr.f32.mxu0 0.0
    %209 = vmatmul.mubr.f32.gmra.mrb[0].mxu0 %v42
    %v210 = vpop.f32.mrb[0].mxu0
    %v211 = vadd.f32 0.0, %v210
    %v212 = vpop.f32.mrb[0].mxu0
    %213 = vmatprep.mubr.f32.mxu0 0.0
    %214 = vmatmul.mubr.f32.gmra.mrb[0].mxu0 %v45
    %v215 = vpop.f32.mrb[0].mxu0
    %v216 = vadd.f32 0.0, %v215
    %v217 = vpop.f32.mrb[0].mxu0
    %218 = vmatprep.mubr.f32.mxu0 0.0
    %219 = vmatmul.mubr.f32.gmra.mrb[0].mxu0 %v48
    %v220 = vpop.f32.mrb[0].mxu0
    %v221 = vadd.f32 0.0, %v220
    %v222 = vpop.f32.mrb[0].mxu0
    %223 = vdwg.mxu0
    %v224 = vtanh.pop %v206
    %v225 = vtanh.pop %v211
    %v226 = vtanh.pop %v216
    %v227 = vtanh.pop %v221
    %228 = vmatprep.subr.mxu0 0.0
    %229 = vmatpush1.xpose.msra.mxu0 %v224
    %230 = vmatprep.subr.mxu0 0.0
    %231 = vmatpush1.xpose.msra.mxu0 0.0
    %232 = vmatprep.subr.mxu0 0.0
    %233 = vmatpush1.xpose.msra.mxu0 0.0
    %234 = vmatprep.subr.mxu0 0.0
    %235 = vmatpush1.xpose.msra.mxu0 0.0
    %236 = vmatprep.subr.mxu0 0.0
    %237 = vmatpush1.xpose.msra.mxu0 0.0
    %238 = vmatprep.subr.mxu0 0.0
    %239 = vmatpush1.xpose.msra.mxu0 0.0
    %240 = vmatprep.subr.mxu0 0.0
    %241 = vmatpush1.xpose.msra.mxu0 0.0
    %242 = vmatprep.subr.mxu0 0.0
    %243 = vmatpush1.xpose.msra.mxu0 0.0
    %244 = vmatprep.subr.mxu0 0.0
    %245 = vmatpush1.xpose.msra.mxu0 0.0
    %246 = vmatprep.subr.mxu0 0.0
    %247 = vmatpush1.xpose.msra.mxu0 0.0
    %248 = vmatprep.subr.mxu0 0.0
    %249 = vmatpush1.xpose.msra.mxu0 0.0
    %250 = vmatprep.subr.mxu0 0.0
    %251 = vmatpush1.xpose.msra.mxu0 0.0
    %252 = vmatprep.subr.mxu0 0.0
    %253 = vmatpush1.xpose.msra.mxu0 0.0
    %254 = vmatprep.subr.mxu0 0.0
    %255 = vmatpush1.xpose.msra.mxu0 0.0
    %256 = vmatprep.subr.mxu0 0.0
    %257 = vmatpush1.xpose.msra.mxu0 0.0
    %258 = vmatprep.subr.mxu0 0.0
    %259 = vmatpush1.xpose.msra.mxu0 0.0
    %260 = vmatprep.subr.mxu0 0.0
    %261 = vmatpush1.xpose.msra.mxu0 0.0
    %262 = vmatprep.subr.mxu0 0.0
    %263 = vmatpush1.xpose.msra.mxu0 0.0
    %264 = vmatprep.subr.mxu0 0.0
    %265 = vmatpush1.xpose.msra.mxu0 0.0
    %266 = vmatprep.subr.mxu0 0.0
    %267 = vmatpush1.xpose.msra.mxu0 0.0
    %268 = vmatprep.subr.mxu0 0.0
    %269 = vmatpush1.xpose.msra.mxu0 0.0
    %270 = vmatprep.subr.mxu0 0.0
    %271 = vmatpush1.xpose.msra.mxu0 0.0
    %272 = vmatprep.subr.mxu0 0.0
    %273 = vmatpush1.xpose.msra.mxu0 0.0
    %274 = vmatprep.subr.mxu0 0.0
    %275 = vmatpush1.xpose.msra.mxu0 0.0
    %276 = vmatprep.subr.mxu0 0.0
    %277 = vmatpush1.xpose.msra.mxu0 0.0
    %278 = vmatprep.subr.mxu0 0.0
    %279 = vmatpush1.xpose.msra.mxu0 0.0
    %280 = vmatprep.subr.mxu0 0.0
    %281 = vmatpush1.xpose.msra.mxu0 0.0
    %282 = vmatprep.subr.mxu0 0.0
    %283 = vmatpush1.xpose.msra.mxu0 0.0
    %284 = vmatprep.subr.mxu0 0.0
    %285 = vmatpush1.xpose.msra.mxu0 0.0
    %286 = vmatprep.subr.mxu0 0.0
    %287 = vmatpush1.xpose.msra.mxu0 0.0
    %288 = vmatprep.subr.mxu0 0.0
    %289 = vmatpush1.xpose.msra.mxu0 0.0
    %290 = vmatprep.subr.mxu0 0.0
    %291 = vmatpush1.xpose.msra.mxu0 0.0
    %292 = vmatprep.mubr.f32.mxu0 0.0
    %293 = vmatmul.mubr.f32.gmra.mrb[0].mxu0 %v135
    %v294 = vpop.f32.mrb[0].mxu0
    %v295 = vadd.f32 0.0, %v294
    %v296 = vpop.f32.mrb[0].mxu0
    %297 = vdwg.mxu0
    %298 = vmatprep.subr.mxu0 0.0
    %299 = vmatpush1.xpose.msra.mxu0 %v225
    %300 = vmatprep.subr.mxu0 0.0
    %301 = vmatpush1.xpose.msra.mxu0 0.0
    %302 = vmatprep.subr.mxu0 0.0
    %303 = vmatpush1.xpose.msra.mxu0 0.0
    %304 = vmatprep.subr.mxu0 0.0
    %305 = vmatpush1.xpose.msra.mxu0 0.0
    %306 = vmatprep.subr.mxu0 0.0
    %307 = vmatpush1.xpose.msra.mxu0 0.0
    %308 = vmatprep.subr.mxu0 0.0
    %309 = vmatpush1.xpose.msra.mxu0 0.0
    %310 = vmatprep.subr.mxu0 0.0
    %311 = vmatpush1.xpose.msra.mxu0 0.0
    %312 = vmatprep.subr.mxu0 0.0
    %313 = vmatpush1.xpose.msra.mxu0 0.0
    %314 = vmatprep.subr.mxu0 0.0
    %315 = vmatpush1.xpose.msra.mxu0 0.0
    %316 = vmatprep.subr.mxu0 0.0
    %317 = vmatpush1.xpose.msra.mxu0 0.0
    %318 = vmatprep.subr.mxu0 0.0
    %319 = vmatpush1.xpose.msra.mxu0 0.0
    %320 = vmatprep.subr.mxu0 0.0
    %321 = vmatpush1.xpose.msra.mxu0 0.0
    %322 = vmatprep.subr.mxu0 0.0
    %323 = vmatpush1.xpose.msra.mxu0 0.0
    %324 = vmatprep.subr.mxu0 0.0
    %325 = vmatpush1.xpose.msra.mxu0 0.0
    %326 = vmatprep.subr.mxu0 0.0
    %327 = vmatpush1.xpose.msra.mxu0 0.0
    %328 = vmatprep.subr.mxu0 0.0
    %329 = vmatpush1.xpose.msra.mxu0 0.0
    %330 = vmatprep.subr.mxu0 0.0
    %331 = vmatpush1.xpose.msra.mxu0 0.0
    %332 = vmatprep.subr.mxu0 0.0
    %333 = vmatpush1.xpose.msra.mxu0 0.0
    %334 = vmatprep.subr.mxu0 0.0
    %335 = vmatpush1.xpose.msra.mxu0 0.0
    %336 = vmatprep.subr.mxu0 0.0
    %337 = vmatpush1.xpose.msra.mxu0 0.0
    %338 = vmatprep.subr.mxu0 0.0
    %339 = vmatpush1.xpose.msra.mxu0 0.0
    %340 = vmatprep.subr.mxu0 0.0
    %341 = vmatpush1.xpose.msra.mxu0 0.0
    %342 = vmatprep.subr.mxu0 0.0
    %343 = vmatpush1.xpose.msra.mxu0 0.0
    %344 = vmatprep.subr.mxu0 0.0
    %345 = vmatpush1.xpose.msra.mxu0 0.0
    %346 = vmatprep.subr.mxu0 0.0
    %347 = vmatpush1.xpose.msra.mxu0 0.0
    %348 = vmatprep.subr.mxu0 0.0
    %349 = vmatpush1.xpose.msra.mxu0 0.0
    %350 = vmatprep.subr.mxu0 0.0
    %351 = vmatpush1.xpose.msra.mxu0 0.0
    %352 = vmatprep.subr.mxu0 0.0
    %353 = vmatpush1.xpose.msra.mxu0 0.0
    %354 = vmatprep.subr.mxu0 0.0
    %355 = vmatpush1.xpose.msra.mxu0 0.0
    %356 = vmatprep.subr.mxu0 0.0
    %357 = vmatpush1.xpose.msra.mxu0 0.0
    %358 = vmatprep.subr.mxu0 0.0
    %359 = vmatpush1.xpose.msra.mxu0 0.0
    %360 = vmatprep.subr.mxu0 0.0
    %361 = vmatpush1.xpose.msra.mxu0 0.0
    %362 = vmatprep.mubr.f32.mxu0 0.0
    %363 = vmatmul.mubr.f32.gmra.mrb[0].mxu0 %v136
    %v364 = vpop.f32.mrb[0].mxu0
    %v365 = vadd.f32 0.0, %v364
    %v366 = vpop.f32.mrb[0].mxu0
    %367 = vdwg.mxu0
    %368 = vmatprep.subr.mxu0 0.0
    %369 = vmatpush1.xpose.msra.mxu0 %v226
    %370 = vmatprep.subr.mxu0 0.0
    %371 = vmatpush1.xpose.msra.mxu0 0.0
    %372 = vmatprep.subr.mxu0 0.0
    %373 = vmatpush1.xpose.msra.mxu0 0.0
    %374 = vmatprep.subr.mxu0 0.0
    %375 = vmatpush1.xpose.msra.mxu0 0.0
    %376 = vmatprep.subr.mxu0 0.0
    %377 = vmatpush1.xpose.msra.mxu0 0.0
    %378 = vmatprep.subr.mxu0 0.0
    %379 = vmatpush1.xpose.msra.mxu0 0.0
    %380 = vmatprep.subr.mxu0 0.0
    %381 = vmatpush1.xpose.msra.mxu0 0.0
    %382 = vmatprep.subr.mxu0 0.0
    %383 = vmatpush1.xpose.msra.mxu0 0.0
    %384 = vmatprep.subr.mxu0 0.0
    %385 = vmatpush1.xpose.msra.mxu0 0.0
    %386 = vmatprep.subr.mxu0 0.0
    %387 = vmatpush1.xpose.msra.mxu0 0.0
    %388 = vmatprep.subr.mxu0 0.0
    %389 = vmatpush1.xpose.msra.mxu0 0.0
    %390 = vmatprep.subr.mxu0 0.0
    %391 = vmatpush1.xpose.msra.mxu0 0.0
    %392 = vmatprep.subr.mxu0 0.0
    %393 = vmatpush1.xpose.msra.mxu0 0.0
    %394 = vmatprep.subr.mxu0 0.0
    %395 = vmatpush1.xpose.msra.mxu0 0.0
    %396 = vmatprep.subr.mxu0 0.0
    %397 = vmatpush1.xpose.msra.mxu0 0.0
    %398 = vmatprep.subr.mxu0 0.0
    %399 = vmatpush1.xpose.msra.mxu0 0.0
    %400 = vmatprep.subr.mxu0 0.0
    %401 = vmatpush1.xpose.msra.mxu0 0.0
    %402 = vmatprep.subr.mxu0 0.0
    %403 = vmatpush1.xpose.msra.mxu0 0.0
    %404 = vmatprep.subr.mxu0 0.0
    %405 = vmatpush1.xpose.msra.mxu0 0.0
    %406 = vmatprep.subr.mxu0 0.0
    %407 = vmatpush1.xpose.msra.mxu0 0.0
    %408 = vmatprep.subr.mxu0 0.0
    %409 = vmatpush1.xpose.msra.mxu0 0.0
    %410 = vmatprep.subr.mxu0 0.0
    %411 = vmatpush1.xpose.msra.mxu0 0.0
    %412 = vmatprep.subr.mxu0 0.0
    %413 = vmatpush1.xpose.msra.mxu0 0.0
    %414 = vmatprep.subr.mxu0 0.0
    %415 = vmatpush1.xpose.msra.mxu0 0.0
    %416 = vmatprep.subr.mxu0 0.0
    %417 = vmatpush1.xpose.msra.mxu0 0.0
    %418 = vmatprep.subr.mxu0 0.0
    %419 = vmatpush1.xpose.msra.mxu0 0.0
    %420 = vmatprep.subr.mxu0 0.0
    %421 = vmatpush1.xpose.msra.mxu0 0.0
    %422 = vmatprep.subr.mxu0 0.0
    %423 = vmatpush1.xpose.msra.mxu0 0.0
    %424 = vmatprep.subr.mxu0 0.0
    %425 = vmatpush1.xpose.msra.mxu0 0.0
    %426 = vmatprep.subr.mxu0 0.0
    %427 = vmatpush1.xpose.msra.mxu0 0.0
    %428 = vmatprep.subr.mxu0 0.0
    %429 = vmatpush1.xpose.msra.mxu0 0.0
    %430 = vmatprep.subr.mxu0 0.0
    %431 = vmatpush1.xpose.msra.mxu0 0.0
    %432 = vmatprep.mubr.f32.mxu0 0.0
    %433 = vmatmul.mubr.f32.gmra.mrb[0].mxu0 %v137
    %v434 = vpop.f32.mrb[0].mxu0
    %v435 = vadd.f32 0.0, %v434
    %v436 = vpop.f32.mrb[0].mxu0
    %437 = vdwg.mxu0
    %438 = vmatprep.subr.mxu0 0.0
    %439 = vmatpush1.xpose.msra.mxu0 %v227
    %440 = vmatprep.subr.mxu0 0.0
    %441 = vmatpush1.xpose.msra.mxu0 0.0
    %442 = vmatprep.subr.mxu0 0.0
    %443 = vmatpush1.xpose.msra.mxu0 0.0
    %444 = vmatprep.subr.mxu0 0.0
    %445 = vmatpush1.xpose.msra.mxu0 0.0
    %446 = vmatprep.subr.mxu0 0.0
    %447 = vmatpush1.xpose.msra.mxu0 0.0
    %448 = vmatprep.subr.mxu0 0.0
    %449 = vmatpush1.xpose.msra.mxu0 0.0
    %450 = vmatprep.subr.mxu0 0.0
    %451 = vmatpush1.xpose.msra.mxu0 0.0
    %452 = vmatprep.subr.mxu0 0.0
    %453 = vmatpush1.xpose.msra.mxu0 0.0
    %454 = vmatprep.subr.mxu0 0.0
    %455 = vmatpush1.xpose.msra.mxu0 0.0
    %456 = vmatprep.subr.mxu0 0.0
    %457 = vmatpush1.xpose.msra.mxu0 0.0
    %458 = vmatprep.subr.mxu0 0.0
    %459 = vmatpush1.xpose.msra.mxu0 0.0
    %460 = vmatprep.subr.mxu0 0.0
    %461 = vmatpush1.xpose.msra.mxu0 0.0
    %462 = vmatprep.subr.mxu0 0.0
    %463 = vmatpush1.xpose.msra.mxu0 0.0
    %464 = vmatprep.subr.mxu0 0.0
    %465 = vmatpush1.xpose.msra.mxu0 0.0
    %466 = vmatprep.subr.mxu0 0.0
    %467 = vmatpush1.xpose.msra.mxu0 0.0
    %468 = vmatprep.subr.mxu0 0.0
    %469 = vmatpush1.xpose.msra.mxu0 0.0
    %470 = vmatprep.subr.mxu0 0.0
    %471 = vmatpush1.xpose.msra.mxu0 0.0
    %472 = vmatprep.subr.mxu0 0.0
    %473 = vmatpush1.xpose.msra.mxu0 0.0
    %474 = vmatprep.subr.mxu0 0.0
    %475 = vmatpush1.xpose.msra.mxu0 0.0
    %476 = vmatprep.subr.mxu0 0.0
    %477 = vmatpush1.xpose.msra.mxu0 0.0
    %478 = vmatprep.subr.mxu0 0.0
    %479 = vmatpush1.xpose.msra.mxu0 0.0
    %480 = vmatprep.subr.mxu0 0.0
    %481 = vmatpush1.xpose.msra.mxu0 0.0
    %482 = vmatprep.subr.mxu0 0.0
    %483 = vmatpush1.xpose.msra.mxu0 0.0
    %484 = vmatprep.subr.mxu0 0.0
    %485 = vmatpush1.xpose.msra.mxu0 0.0
    %486 = vmatprep.subr.mxu0 0.0
    %487 = vmatpush1.xpose.msra.mxu0 0.0
    %488 = vmatprep.subr.mxu0 0.0
    %489 = vmatpush1.xpose.msra.mxu0 0.0
    %490 = vmatprep.subr.mxu0 0.0
    %491 = vmatpush1.xpose.msra.mxu0 0.0
    %492 = vmatprep.subr.mxu0 0.0
    %493 = vmatpush1.xpose.msra.mxu0 0.0
    %494 = vmatprep.subr.mxu0 0.0
    %495 = vmatpush1.xpose.msra.mxu0 0.0
    %496 = vmatprep.subr.mxu0 0.0
    %497 = vmatpush1.xpose.msra.mxu0 0.0
    %498 = vmatprep.subr.mxu0 0.0
    %499 = vmatpush1.xpose.msra.mxu0 0.0
    %500 = vmatprep.subr.mxu0 0.0
    %501 = vmatpush1.xpose.msra.mxu0 0.0
    %502 = vmatprep.mubr.f32.mxu0 0.0
    %503 = vmatmul.mubr.f32.gmra.mrb[0].mxu0 %v138
    %v504 = vpop.f32.mrb[0].mxu0
    %v505 = vadd.f32 0.0, %v504
    %v506 = vpop.f32.mrb[0].mxu0
    %507 = vdwg.mxu0
    %v508 = vrcp.pop 10.0
    %v509 = vmul.f32 %v295, %v508
    %v510 = vmul.f32 %v365, %v508
    %v511 = vmul.f32 %v435, %v508
    %v512 = vmul.f32 %v505, %v508
    %vm513 = vcmask 64512
    %514 = vst.msk [vmem:[#allocation2] sm:$0xff] %vm513, %v509
    %515 = vst.msk [vmem:[#allocation2 + $0x8] sm:$0xff] %vm513, %v510
    %516 = vst.msk [vmem:[#allocation2 + $0x10] sm:$0xff] %vm513, %v511
    %517 = vst.msk [vmem:[#allocation2 + $0x18] sm:$0xff] %vm513, %v512
    %v518 = vmul.f32 %v509, %v28
    %v519 = vmul.f32 %v510, %v28
    %v520 = vmul.f32 %v511, %v28
    %v521 = vmul.f32 %v512, %v28
    %v524 = vunpack.c.l.s4 1966171168
    %v525 = vunpack.c.0.s8 %v524
    %v526 = vlaneseq
    %v527 = vshrl.u32 %v526, 7
    %v528 = vsub.s32 %v525, %v527
    %v529 = vrot.slane %v27, %v528
    %v530 = vcombine.high %v529, %v529
    %v532 = vunpack.c.l.s4 1966171168
    %v533 = vunpack.c.0.s8 %v532
    %v534 = vlaneseq
    %v535 = vshrl.u32 %v534, 7
    %v536 = vsub.s32 %v533, %v535
    %v537 = vrot.slane %v529, %v536
    %v539 = vunpack.c.l.s4 1966171168
    %v540 = vunpack.c.0.s8 %v539
    %v541 = vlaneseq
    %v542 = vshrl.u32 %v541, 7
    %v543 = vsub.s32 %v540, %v542
    %v544 = vrot.slane %v530, %v543
    %v545 = vcombine.high %v537, %v537
    %v546 = vcombine.high %v544, %v544
    %v547 = vlaneseq
    %v548 = vshrl.u32 %v547, 7
    %v549 = vsub.s32 0, %v548
    %v550 = vrot.slane %v537, %v549
    %v551 = vlaneseq
    %v552 = vshrl.u32 %v551, 7
    %v553 = vsub.s32 0, %v552
    %v554 = vrot.slane %v544, %v553
    %v555 = vlaneseq
    %v556 = vshrl.u32 %v555, 7
    %v557 = vsub.s32 0, %v556
    %v558 = vrot.slane %v545, %v557
    %v559 = vlaneseq
    %v560 = vshrl.u32 %v559, 7
    %v561 = vsub.s32 0, %v560
    %v562 = vrot.slane %v546, %v561
    %v567 = vmul.f32 %v518, %v550
    %v568 = vmul.f32 %v519, %v554
    %v569 = vmul.f32 %v520, %v558
    %v570 = vmul.f32 %v521, %v562
    %v571 = vsel %vm513, %v567, 0.0
    %572 = vadd.xlane.f32.xlu0 %v571
    %v573 = vpop.xlane.xlu0 %572
    %v574 = vsel %vm513, %v568, 0.0
    %575 = vadd.xlane.f32.xlu0 %v574
    %v576 = vpop.xlane.xlu0 %575
    %v577 = vsel %vm513, %v569, 0.0
    %578 = vadd.xlane.f32.xlu0 %v577
    %v579 = vpop.xlane.xlu0 %578
    %v580 = vsel %vm513, %v570, 0.0
    %581 = vadd.xlane.f32.xlu0 %v580
    %v582 = vpop.xlane.xlu0 %581
    %v583 = vlaneseq
    %v584 = vshrl.u32 %v583, 7
    %v585 = vsub.s32 0, %v584
    %v586 = vrot.slane %v27, %v585
    %588 = vbcast.lane.b32.xlu0 %v586, 256
    %v589 = vpop.permute.xlu0 %588
    %v590 = vlaneseq
    %v591 = vshrl.u32 %v590, 7
    %v592 = vsub.s32 1, %v591
    %v593 = vrot.slane %v27, %v592
    %595 = vbcast.lane.b32.xlu0 %v593, 256
    %v596 = vpop.permute.xlu0 %595
    %v597 = vlaneseq
    %v598 = vshrl.u32 %v597, 7
    %v599 = vsub.s32 2, %v598
    %v600 = vrot.slane %v27, %v599
    %602 = vbcast.lane.b32.xlu0 %v600, 256
    %v603 = vpop.permute.xlu0 %602
    %v604 = vlaneseq
    %v605 = vshrl.u32 %v604, 7
    %v606 = vsub.s32 3, %v605
    %v607 = vrot.slane %v27, %v606
    %609 = vbcast.lane.b32.xlu0 %v607, 256
    %v610 = vpop.permute.xlu0 %609
    %v615 = vmul.f32 %v573, %v589
    %v616 = vmul.f32 %v576, %v596
    %v617 = vmul.f32 %v579, %v603
    %v618 = vmul.f32 %v582, %v610
    %623 = vset.pattern.permute.xlu0 0
    %624 = vperm.xlu0 %623, %v615
    %v625 = vpop.permute.xlu0 %624
    %626 = vset.pattern.permute.xlu0 0
    %627 = vperm.xlu0 %626, %v616
    %v628 = vpop.permute.xlu0 %627
    %629 = vset.pattern.permute.xlu0 0
    %630 = vperm.xlu0 %629, %v617
    %v631 = vpop.permute.xlu0 %630
    %632 = vset.pattern.permute.xlu0 0
    %633 = vperm.xlu0 %632, %v618
    %v634 = vpop.permute.xlu0 %633
    %v635 = vlaneseq
    %v636 = vand.u32 %v635, 127
    %v637 = vlaneseq
    %v638 = vshrl.u32 %v637, 7
    %v639 = vsub.s32 %v636, %v638
    %v640 = vrot.slane %v625, %v639
    %v641 = vlaneseq
    %v642 = vshrl.u32 %v641, 7
    %v643 = vsub.s32 %v636, %v642
    %v644 = vrot.slane %v628, %v643
    %v645 = vlaneseq
    %v646 = vshrl.u32 %v645, 7
    %v647 = vsub.s32 %v636, %v646
    %v648 = vrot.slane %v631, %v647
    %v649 = vlaneseq
    %v650 = vshrl.u32 %v649, 7
    %v651 = vsub.s32 %v636, %v650
    %v652 = vrot.slane %v634, %v651
    %vm653 = vcmask 1041409
    %v654 = vsel %vm653, %v644, %v640
    %vm655 = vcmask 1042434
    %v656 = vsel %vm655, %v648, %v654
    %vm657 = vcmask 1043459
    %v658 = vsel %vm657, %v652, %v656
    %vm660 = vcmask 60416
    %v661 = vsel %vm660, %v658, -inf
    %662 = vmax.xlane.f32.xlu0 %v661
    %v663 = vpop.xlane.xlu0 %662
    %v665 = vlaneseq
    %v666 = vshrl.u32 %v665, 7
    %v667 = vsub.s32 0, %v666
    %v668 = vrot.slane %v663, %v667
    %v669 = vlaneseq
    %v670 = vshrl.u32 %v669, 7
    %v671 = vsub.s32 1, %v670
    %v672 = vrot.slane %v663, %v671
    %v673 = vlaneseq
    %v674 = vshrl.u32 %v673, 7
    %v675 = vsub.s32 2, %v674
    %v676 = vrot.slane %v663, %v675
    %v677 = vlaneseq
    %v678 = vshrl.u32 %v677, 7
    %v679 = vsub.s32 3, %v678
    %v680 = vrot.slane %v663, %v679
    %v685 = vsub.f32 %v615, %v668
    %v686 = vsub.f32 %v616, %v672
    %v687 = vsub.f32 %v617, %v676
    %v688 = vsub.f32 %v618, %v680
    %v689 = vmul.f32 %v685, 1.442695
    %v690 = vpow.pop %v689
    %v691 = vmul.f32 %v686, 1.442695
    %v692 = vpow.pop %v691
    %v693 = vmul.f32 %v687, 1.442695
    %v694 = vpow.pop %v693
    %v695 = vmul.f32 %v688, 1.442695
    %v696 = vpow.pop %v695
    %701 = vset.pattern.permute.xlu0 0
    %702 = vperm.xlu0 %701, %v690
    %v703 = vpop.permute.xlu0 %702
    %704 = vset.pattern.permute.xlu0 0
    %705 = vperm.xlu0 %704, %v692
    %v706 = vpop.permute.xlu0 %705
    %707 = vset.pattern.permute.xlu0 0
    %708 = vperm.xlu0 %707, %v694
    %v709 = vpop.permute.xlu0 %708
    %710 = vset.pattern.permute.xlu0 0
    %711 = vperm.xlu0 %710, %v696
    %v712 = vpop.permute.xlu0 %711
    %v713 = vlaneseq
    %v714 = vshrl.u32 %v713, 7
    %v715 = vsub.s32 %v636, %v714
    %v716 = vrot.slane %v703, %v715
    %v717 = vlaneseq
    %v718 = vshrl.u32 %v717, 7
    %v719 = vsub.s32 %v636, %v718
    %v720 = vrot.slane %v706, %v719
    %v721 = vlaneseq
    %v722 = vshrl.u32 %v721, 7
    %v723 = vsub.s32 %v636, %v722
    %v724 = vrot.slane %v709, %v723
    %v725 = vlaneseq
    %v726 = vshrl.u32 %v725, 7
    %v727 = vsub.s32 %v636, %v726
    %v728 = vrot.slane %v712, %v727
    %v729 = vsel %vm653, %v720, %v716
    %v730 = vsel %vm655, %v724, %v729
    %v731 = vsel %vm657, %v728, %v730
    %v733 = vsel %vm660, %v731, 0.0
    %734 = vadd.xlane.f32.xlu0 %v733
    %v735 = vpop.xlane.xlu0 %734
    %v737 = vlaneseq
    %v738 = vshrl.u32 %v737, 7
    %v739 = vsub.s32 0, %v738
    %v740 = vrot.slane %v735, %v739
    %v741 = vlaneseq
    %v742 = vshrl.u32 %v741, 7
    %v743 = vsub.s32 1, %v742
    %v744 = vrot.slane %v735, %v743
    %v745 = vlaneseq
    %v746 = vshrl.u32 %v745, 7
    %v747 = vsub.s32 2, %v746
    %v748 = vrot.slane %v735, %v747
    %v749 = vlaneseq
    %v750 = vshrl.u32 %v749, 7
    %v751 = vsub.s32 3, %v750
    %v752 = vrot.slane %v735, %v751
    %v757 = vrcp.pop %v740
    %v758 = vmul.f32 %v690, %v757
    %v759 = vrcp.pop %v744
    %v760 = vmul.f32 %v692, %v759
    %v761 = vrcp.pop %v748
    %v762 = vmul.f32 %v694, %v761
    %v763 = vrcp.pop %v752
    %v764 = vmul.f32 %v696, %v763
    %v765 = vmul.f32 %v758, %v589
    %v766 = vmul.f32 %v760, %v596
    %v767 = vmul.f32 %v762, %v603
    %v768 = vmul.f32 %v764, %v610
    %773 = vset.pattern.permute.xlu0 0
    %774 = vperm.xlu0 %773, %v765
    %v775 = vpop.permute.xlu0 %774
    %776 = vset.pattern.permute.xlu0 0
    %777 = vperm.xlu0 %776, %v766
    %v778 = vpop.permute.xlu0 %777
    %779 = vset.pattern.permute.xlu0 0
    %780 = vperm.xlu0 %779, %v767
    %v781 = vpop.permute.xlu0 %780
    %782 = vset.pattern.permute.xlu0 0
    %783 = vperm.xlu0 %782, %v768
    %v784 = vpop.permute.xlu0 %783
    %v785 = vlaneseq
    %v786 = vshrl.u32 %v785, 7
    %v787 = vsub.s32 %v636, %v786
    %v788 = vrot.slane %v775, %v787
    %v789 = vlaneseq
    %v790 = vshrl.u32 %v789, 7
    %v791 = vsub.s32 %v636, %v790
    %v792 = vrot.slane %v778, %v791
    %v793 = vlaneseq
    %v794 = vshrl.u32 %v793, 7
    %v795 = vsub.s32 %v636, %v794
    %v796 = vrot.slane %v781, %v795
    %v797 = vlaneseq
    %v798 = vshrl.u32 %v797, 7
    %v799 = vsub.s32 %v636, %v798
    %v800 = vrot.slane %v784, %v799
    %v801 = vsel %vm653, %v792, %v788
    %v802 = vsel %vm655, %v796, %v801
    %v803 = vsel %vm657, %v800, %v802
    %v805 = vsel %vm660, %v803, 0.0
    %806 = vadd.xlane.f32.xlu0 %v805
    %v807 = vpop.xlane.xlu0 %806
    %v809 = vlaneseq
    %v810 = vshrl.u32 %v809, 7
    %v811 = vsub.s32 0, %v810
    %v812 = vrot.slane %v807, %v811
    %v813 = vlaneseq
    %v814 = vshrl.u32 %v813, 7
    %v815 = vsub.s32 1, %v814
    %v816 = vrot.slane %v807, %v815
    %v817 = vlaneseq
    %v818 = vshrl.u32 %v817, 7
    %v819 = vsub.s32 2, %v818
    %v820 = vrot.slane %v807, %v819
    %v821 = vlaneseq
    %v822 = vshrl.u32 %v821, 7
    %v823 = vsub.s32 3, %v822
    %v824 = vrot.slane %v807, %v823
    %v829 = vrcp.pop %v812
    %v830 = vmul.f32 %v765, %v829
    %v831 = vrcp.pop %v816
    %v832 = vmul.f32 %v766, %v831
    %v833 = vrcp.pop %v820
    %v834 = vmul.f32 %v767, %v833
    %v835 = vrcp.pop %v824
    %v836 = vmul.f32 %v768, %v835
    %838 = vset.pattern.permute.xlu0 0
    %839 = vperm.xlu0 %838, %v830
    %v840 = vpop.permute.xlu0 %839
    %843 = vset.pattern.permute.xlu0 0
    %844 = vperm.xlu0 %843, %v832
    %v845 = vpop.permute.xlu0 %844
    %848 = vset.pattern.permute.xlu0 0
    %849 = vperm.xlu0 %848, %v834
    %v850 = vpop.permute.xlu0 %849
    %853 = vset.pattern.permute.xlu0 0
    %854 = vperm.xlu0 %853, %v836
    %v855 = vpop.permute.xlu0 %854
    %v857 = vmul.f32 %v840, %v23
    %v858 = vmul.f32 %v845, %v24
    %v859 = vmul.f32 %v850, %v25
    %v860 = vmul.f32 %v855, %v26
    %v861 = vsel %vm37, %v857, 0.0
    %v862 = vrot.slane %v861, 4
    %v863 = vadd.f32 %v861, %v862
    %v864 = vrot.slane %v863, 2
    %v865 = vadd.f32 %v863, %v864
    %v866 = vrot.slane %v865, 1
    %v867 = vadd.f32 %v865, %v866
    %v868 = vsel %vm37, %v858, 0.0
    %v869 = vrot.slane %v868, 4
    %v870 = vadd.f32 %v868, %v869
    %v871 = vrot.slane %v870, 2
    %v872 = vadd.f32 %v870, %v871
    %v873 = vrot.slane %v872, 1
    %v874 = vadd.f32 %v872, %v873
    %v875 = vsel %vm37, %v859, 0.0
    %v876 = vrot.slane %v875, 4
    %v877 = vadd.f32 %v875, %v876
    %v878 = vrot.slane %v877, 2
    %v879 = vadd.f32 %v877, %v878
    %v880 = vrot.slane %v879, 1
    %v881 = vadd.f32 %v879, %v880
    %v882 = vsel %vm37, %v860, 0.0
    %v883 = vrot.slane %v882, 4
    %v884 = vadd.f32 %v882, %v883
    %v885 = vrot.slane %v884, 2
    %v886 = vadd.f32 %v884, %v885
    %v887 = vrot.slane %v886, 1
    %v888 = vadd.f32 %v886, %v887
    %v893 = vsel %vm653, %v874, %v867
    %v894 = vsel %vm655, %v881, %v893
    %v895 = vsel %vm657, %v888, %v894
    %vm897 = vcmask 257024
    %898 = vst.msk [vmem:[%s5] sm:$0xf] %vm897, %v895
    // Predicated region
    $region22: #{piecl_forward.3} parent=1 // pred_check
      _
    $region23: #{piecl_forward.3} parent=1 // pred_check_branch
      %900 = sbr.rel (0) target = $region25
    $region24: #{piecl_forward.3} parent=1 // pred_region
      _
    $region25: #{piecl_forward.3} parent=1 // pred_fallthru
      _
    // Predicated region
    $region26: #{piecl_forward.3} parent=1 // pred_check
      _
    $region27: #{piecl_forward.3} parent=1 // pred_check_branch
      %902 = sbr.rel (0) target = $region29
    $region28: #{piecl_forward.3} parent=1 // pred_region
      %s904 = ssub.s32 512, 512
      %905 = vsyncadd [#allocation3], %s904
      %s906 = sshll.u32 [#allocation2], 4
      %s907 = int_to_ptr.vmem [resolvable:$true] %s906
      %912 = dma.vmem_to_hbm [thread:$0]  %s907, 512, %s6, [#allocation3], 128, 128, 8
    $region29: #{piecl_forward.3} parent=1 // pred_fallthru
      _
    // Predicated region
    $region30: #{piecl_forward.3} parent=1 // pred_check
      _
    $region31: #{piecl_forward.3} parent=1 // pred_check_branch
      %914 = sbr.rel (0) target = $region33
    $region32: #{piecl_forward.3} parent=1 // pred_region
      _
    $region33: #{piecl_forward.3} parent=1 // pred_fallthru
      _
    // Predicated region
    $region34: #{piecl_forward.3} parent=1 // pred_check
      _
    $region35: #{piecl_forward.3} parent=1 // pred_check_branch
      %916 = sbr.rel (0) target = $region37
    $region36: #{piecl_forward.3} parent=1 // pred_region
      %917 = dma.done [#allocation3], 512
    $region37: #{piecl_forward.3} parent=1 // pred_fallthru
      _
    %918 = vsyncpa [#allocation3], 1

</llo_original>
